<compile_context>
chip_gen: v7x
topology: tpu7x:2x2x1
jax: 0.10.0
libtpu: 0.0.40
codegen_flags: <defaults>
</compile_context>

<pallas_src>
import jax
import jax.numpy as jnp
from jax.experimental import pallas as pl
from jax.experimental.pallas import tpu as pltpu

# ----- Small synthetic CLIP (ViT) image-encoder hyperparameters -----
BATCH = 2
IMG_CH = 3
IMG_SIZE = 16
PATCH = 8
GRID = IMG_SIZE // PATCH            # 2
NUM_PATCHES = GRID * GRID           # 4
NUM_TOKENS = NUM_PATCHES + 1        # 5  (class token + patches)
PAD_TOKENS = 8                      # tokens padded to one full sublane group
WIDTH = 32                          # transformer width
NUM_HEADS = 4
HEAD_DIM = WIDTH // NUM_HEADS       # 8
NUM_LAYERS = 2
EMBED_DIM = 16
PATCH_DIM = IMG_CH * PATCH * PATCH  # 192
PATCH_DIM_PAD = 256                 # zero-padded to a lane-aligned contraction dim
ATTN_SCALE = 1.0 / (HEAD_DIM ** 0.5)
NEG_BIG = -1e9                      # additive mask for invalid key columns


def _layernorm(x, g, b, eps=1e-5):
    mu = jnp.mean(x, axis=-1, keepdims=True)
    var = jnp.mean(jnp.square(x - mu), axis=-1, keepdims=True)
    return (x - mu) * jax.lax.rsqrt(var + eps) * g + b


def clip_encode_image_kernel(
    patches_ref, convw_ref, clspos_ref, mask_ref,
    lnpre_g_ref, lnpre_b_ref,
    ln1_g_ref, ln1_b_ref, wqkv_ref, bqkv_ref, wout_ref, bout_ref,
    ln2_g_ref, ln2_b_ref, wfc1_ref, bfc1_ref, wfc2_ref, bfc2_ref,
    lnpost_g_ref, lnpost_b_ref, proj_ref, out_ref):
    rows = patches_ref.shape[0]               # B * PAD_TOKENS (sublane aligned)
    batch = rows // PAD_TOKENS
    bf16 = jnp.bfloat16

    # Patch embedding for the whole fused batch as one bf16 matmul (f32 accumulate);
    # padded rows / padded feature columns are zero.
    x = jnp.dot(patches_ref[...], convw_ref[...],
                preferred_element_type=jnp.float32)                 # (rows, WIDTH) f32
    # class token + positional embedding: single (PAD_TOKENS, WIDTH) block broadcast
    # over the batch in-kernel (no host-side tiling).
    x = (x.reshape(batch, PAD_TOKENS, WIDTH) + clspos_ref[...]).reshape(rows, WIDTH)
    x = _layernorm(x, lnpre_g_ref[...], lnpre_b_ref[...])
    mask = mask_ref[...]                      # (H*rows, H*rows) block-diag + key-pad

    # NOTE: layer weights held resident (tiny); see TODO(synk) above for real sizes.
    for l in range(NUM_LAYERS):
        # --- Multi-head self-attention: x = x + MHA(LN1(x)) ---
        h = _layernorm(x, ln1_g_ref[l:l + 1, :], ln1_b_ref[l:l + 1, :])
        # Fused QKV projection (ATTN_SCALE pre-folded into the Q columns).
        qkv = jnp.dot(h.astype(bf16), wqkv_ref[l],
                      preferred_element_type=jnp.float32) + bqkv_ref[l:l + 1, :]
        # Regroup heads onto sublanes with static slices + concat (no batched dots):
        # row index of qf/kf/vf = head * rows + (batch * PAD_TOKENS + token).
        qf = jnp.concatenate(
            [qkv[:, hh * HEAD_DIM:(hh + 1) * HEAD_DIM] for hh in range(NUM_HEADS)],
            axis=0)                                                  # (H*rows, D)
        kf = jnp.concatenate(
            [qkv[:, WIDTH + hh * HEAD_DIM:WIDTH + (hh + 1) * HEAD_DIM]
             for hh in range(NUM_HEADS)], axis=0)
        vf = jnp.concatenate(
            [qkv[:, 2 * WIDTH + hh * HEAD_DIM:2 * WIDTH + (hh + 1) * HEAD_DIM]
             for hh in range(NUM_HEADS)], axis=0)

        # One score matmul, one softmax, one PV matmul for ALL batches and heads.
        s = jax.lax.dot_general(qf.astype(bf16), kf.astype(bf16),
                                (((1,), (1,)), ((), ())),
                                preferred_element_type=jnp.float32)  # (H*rows, H*rows)
        s = s + mask                            # keep same (batch, head) block + drop pad keys
        s = s - jnp.max(s, axis=-1, keepdims=True)
        p = jnp.exp(s)
        p = p * pl.reciprocal(jnp.sum(p, axis=-1, keepdims=True), approx=True)
        of = jnp.dot(p.astype(bf16), vf.astype(bf16),
                     preferred_element_type=jnp.float32)             # (H*rows, D)

        # Re-assemble heads on lanes and do a single output projection matmul.
        o = jnp.concatenate(
            [of[hh * rows:(hh + 1) * rows, :] for hh in range(NUM_HEADS)],
            axis=-1)                                                 # (rows, WIDTH)
        attn = jnp.dot(o.astype(bf16), wout_ref[l],
                       preferred_element_type=jnp.float32) + bout_ref[l:l + 1, :]
        x = x + attn

        # --- MLP: x = x + FC2(QuickGELU(FC1(LN2(x)))) ---
        h = _layernorm(x, ln2_g_ref[l:l + 1, :], ln2_b_ref[l:l + 1, :])
        m = jnp.dot(h.astype(bf16), wfc1_ref[l],
                    preferred_element_type=jnp.float32) + bfc1_ref[l:l + 1, :]
        m = m * jax.nn.sigmoid(1.702 * m)
        m = jnp.dot(m.astype(bf16), wfc2_ref[l],
                    preferred_element_type=jnp.float32) + bfc2_ref[l:l + 1, :]
        x = x + m

    # Final LayerNorm on the class tokens (row 0 of each image) + projection.
    cls_tok = x.reshape(batch, PAD_TOKENS, WIDTH)[:, 0, :]           # (B, WIDTH)
    cls_tok = _layernorm(cls_tok, lnpost_g_ref[...], lnpost_b_ref[...])
    out_ref[...] = jnp.dot(cls_tok.astype(bf16), proj_ref[...],
                           preferred_element_type=jnp.float32)       # (B, EMBED_DIM)


def init_params():
    """Deterministic synthetic CLIP-ViT encoder parameters (PyTorch-like layout)."""
    keys = jax.random.split(jax.random.PRNGKey(0), 12)
    s = 0.02
    p = {}
    # conv1 weight (PyTorch: (WIDTH, C, P, P), no bias) stored transposed as (PATCH_DIM, WIDTH)
    p["conv_w"] = (jax.random.normal(keys[0], (PATCH_DIM, WIDTH)) * s).astype(jnp.float32)
    p["cls"] = (jax.random.normal(keys[1], (1, WIDTH)) * s).astype(jnp.float32)
    p["pos"] = (jax.random.normal(keys[2], (NUM_TOKENS, WIDTH)) * s).astype(jnp.float32)
    p["lnpre_g"] = jnp.ones((1, WIDTH), jnp.float32)
    p["lnpre_b"] = jnp.zeros((1, WIDTH), jnp.float32)
    p["ln1_g"] = jnp.ones((NUM_LAYERS, WIDTH), jnp.float32)
    p["ln1_b"] = jnp.zeros((NUM_LAYERS, WIDTH), jnp.float32)
    p["wqkv"] = (jax.random.normal(keys[3], (NUM_LAYERS, WIDTH, 3 * WIDTH)) * s).astype(jnp.float32)
    p["bqkv"] = jnp.zeros((NUM_LAYERS, 3 * WIDTH), jnp.float32)
    p["wout"] = (jax.random.normal(keys[4], (NUM_LAYERS, WIDTH, WIDTH)) * s).astype(jnp.float32)
    p["bout"] = jnp.zeros((NUM_LAYERS, WIDTH), jnp.float32)
    p["ln2_g"] = jnp.ones((NUM_LAYERS, WIDTH), jnp.float32)
    p["ln2_b"] = jnp.zeros((NUM_LAYERS, WIDTH), jnp.float32)
    p["wfc1"] = (jax.random.normal(keys[5], (NUM_LAYERS, WIDTH, 4 * WIDTH)) * s).astype(jnp.float32)
    p["bfc1"] = jnp.zeros((NUM_LAYERS, 4 * WIDTH), jnp.float32)
    p["wfc2"] = (jax.random.normal(keys[6], (NUM_LAYERS, 4 * WIDTH, WIDTH)) * s).astype(jnp.float32)
    p["bfc2"] = jnp.zeros((NUM_LAYERS, WIDTH), jnp.float32)
    p["lnpost_g"] = jnp.ones((1, WIDTH), jnp.float32)
    p["lnpost_b"] = jnp.zeros((1, WIDTH), jnp.float32)
    p["proj"] = (jax.random.normal(keys[7], (WIDTH, EMBED_DIM)) * (WIDTH ** -0.5)).astype(jnp.float32)
    return p


def clip_encode_image(x, params):
    """x: (B, C, H, W) float32 (NCHW). Returns image features (B, EMBED_DIM)."""
    B, C, H, W = x.shape
    gh, gw = H // PATCH, W // PATCH
    bf16 = jnp.bfloat16

    # ---- plain-JAX glue: patch extraction + token (5->8) and lane (192->256) padding ----
    patches = (x.reshape(B, C, gh, PATCH, gw, PATCH)
                .transpose(0, 2, 4, 1, 3, 5)
                .reshape(B, gh * gw, C * PATCH * PATCH)).astype(jnp.float32)
    padded = jnp.zeros((B, PAD_TOKENS, PATCH_DIM_PAD), jnp.float32)
    padded = padded.at[:, 1:1 + NUM_PATCHES, :PATCH_DIM].set(patches)
    padded = padded.reshape(B * PAD_TOKENS, PATCH_DIM_PAD).astype(bf16)  # (B*8, 256) bf16

    # ---- host-side parameter prep (free) ----
    conv_w = jnp.zeros((PATCH_DIM_PAD, WIDTH), jnp.float32)
    conv_w = conv_w.at[:PATCH_DIM, :].set(params["conv_w"]).astype(bf16)

    # class token + positional embedding, token-padded; broadcast over batch in-kernel.
    clspos = jnp.zeros((PAD_TOKENS, WIDTH), jnp.float32)
    clspos = clspos.at[0, :].set(params["cls"][0] + params["pos"][0])
    clspos = clspos.at[1:NUM_TOKENS, :].set(params["pos"][1:])

    # Additive attention mask for the flattened (head, batch, token) score matrix:
    # row/col index = head * (B*PAD_TOKENS) + batch * PAD_TOKENS + token.
    n = NUM_HEADS * B * PAD_TOKENS
    ids = jnp.arange(n)
    same_block = (ids[:, None] // PAD_TOKENS) == (ids[None, :] // PAD_TOKENS)
    key_valid = (ids[None, :] % PAD_TOKENS) < NUM_TOKENS
    mask = jnp.where(same_block & key_valid,
                     jnp.float32(0.0), jnp.float32(NEG_BIG))          # (n, n)

    # Fused QKV weights with the attention scale folded into the Q columns; bf16 weights.
    scale_cols = jnp.concatenate([jnp.full((WIDTH,), ATTN_SCALE, jnp.float32),
                                  jnp.ones((2 * WIDTH,), jnp.float32)])
    wqkv = (params["wqkv"] * scale_cols[None, None, :]).astype(bf16)   # (L, 32, 96)
    bqkv = (params["bqkv"] * scale_cols[None, :]).astype(jnp.float32)  # (L, 96)

    param_list = [
        conv_w, clspos, mask,
        params["lnpre_g"], params["lnpre_b"],
        params["ln1_g"], params["ln1_b"],
        wqkv, bqkv,
        params["wout"].astype(bf16), params["bout"],
        params["ln2_g"], params["ln2_b"],
        params["wfc1"].astype(bf16), params["bfc1"],
        params["wfc2"].astype(bf16), params["bfc2"],
        params["lnpost_g"], params["lnpost_b"], params["proj"].astype(bf16),
    ]

    # Single gridless invocation: the whole batch is fused (no per-batch pipeline
    # bookkeeping) and all operands live in VMEM once.
    out = pl.pallas_call(
        clip_encode_image_kernel,
        out_shape=jax.ShapeDtypeStruct((B, EMBED_DIM), jnp.float32),
    )(padded, *param_list)
    return out


if __name__ == "__main__":
    params = init_params()
    x = jax.random.normal(jax.random.PRNGKey(0),
                          (BATCH, IMG_CH, IMG_SIZE, IMG_SIZE), dtype=jnp.float32)
    feats = clip_encode_image(x, params)
    jax.block_until_ready(feats)
    assert feats.shape == (BATCH, EMBED_DIM)
    assert bool(jnp.all(jnp.isfinite(feats)))
    print("KERNEL_OK")
</pallas_src>

<mosaic_0001>
module attributes {stable_mosaic.version = 11 : i64} {
  func.func @clip_encode_image_kernel(%arg0: memref<16x256xbf16, #tpu.memory_space<vmem>>, %arg1: memref<256x32xbf16, #tpu.memory_space<vmem>>, %arg2: memref<8x32xf32, #tpu.memory_space<vmem>>, %arg3: memref<64x64xf32, #tpu.memory_space<vmem>>, %arg4: memref<1x32xf32, #tpu.memory_space<vmem>>, %arg5: memref<1x32xf32, #tpu.memory_space<vmem>>, %arg6: memref<2x32xf32, #tpu.memory_space<vmem>>, %arg7: memref<2x32xf32, #tpu.memory_space<vmem>>, %arg8: memref<2x32x96xbf16, #tpu.memory_space<vmem>>, %arg9: memref<2x96xf32, #tpu.memory_space<vmem>>, %arg10: memref<2x32x32xbf16, #tpu.memory_space<vmem>>, %arg11: memref<2x32xf32, #tpu.memory_space<vmem>>, %arg12: memref<2x32xf32, #tpu.memory_space<vmem>>, %arg13: memref<2x32xf32, #tpu.memory_space<vmem>>, %arg14: memref<2x32x128xbf16, #tpu.memory_space<vmem>>, %arg15: memref<2x128xf32, #tpu.memory_space<vmem>>, %arg16: memref<2x128x32xbf16, #tpu.memory_space<vmem>>, %arg17: memref<2x32xf32, #tpu.memory_space<vmem>>, %arg18: memref<1x32xf32, #tpu.memory_space<vmem>>, %arg19: memref<1x32xf32, #tpu.memory_space<vmem>>, %arg20: memref<32x16xbf16, #tpu.memory_space<vmem>>, %arg21: memref<2x16xf32, #tpu.memory_space<vmem>>) attributes {dimension_semantics = [], scalar_prefetch = 0 : i64, scratch_operands = 0 : i64, tpu.core_type = #tpu.core_type<tc>} {
    %c0 = arith.constant 0 : index
    %c0_0 = arith.constant 0 : index
    %0 = vector.load %arg0[%c0, %c0_0] : memref<16x256xbf16, #tpu.memory_space<vmem>>, vector<16x256xbf16>
    %c0_1 = arith.constant 0 : index
    %c0_2 = arith.constant 0 : index
    %1 = vector.load %arg1[%c0_1, %c0_2] : memref<256x32xbf16, #tpu.memory_space<vmem>>, vector<256x32xbf16>
    %cst = arith.constant dense<0.000000e+00> : vector<16x32xf32>
    %2 = tpu.matmul %0, %1, %cst {dimension_numbers = #tpu.dot_dimension_numbers<[1], [0], [0], [1], [0, 0, 1, 1], [], []>} : vector<16x256xbf16>, vector<256x32xbf16>, vector<16x32xf32> -> vector<16x32xf32>
    %3 = vector.shape_cast %2 : vector<16x32xf32> to vector<2x8x32xf32>
    %c0_3 = arith.constant 0 : index
    %c0_4 = arith.constant 0 : index
    %4 = vector.load %arg2[%c0_3, %c0_4] : memref<8x32xf32, #tpu.memory_space<vmem>>, vector<8x32xf32>
    %5 = vector.shape_cast %4 : vector<8x32xf32> to vector<1x8x32xf32>
    %6 = vector.broadcast %5 : vector<1x8x32xf32> to vector<2x8x32xf32>
    %7 = arith.addf %3, %6 : vector<2x8x32xf32>
    %8 = vector.shape_cast %7 : vector<2x8x32xf32> to vector<16x32xf32>
    %c0_5 = arith.constant 0 : index
    %c0_6 = arith.constant 0 : index
    %9 = vector.load %arg4[%c0_5, %c0_6] : memref<1x32xf32, #tpu.memory_space<vmem>>, vector<1x32xf32>
    %c0_7 = arith.constant 0 : index
    %c0_8 = arith.constant 0 : index
    %10 = vector.load %arg5[%c0_7, %c0_8] : memref<1x32xf32, #tpu.memory_space<vmem>>, vector<1x32xf32>
    %cst_9 = arith.constant dense<0.000000e+00> : vector<16xf32>
    %11 = vector.multi_reduction <add>, %8, %cst_9 [1] : vector<16x32xf32> to vector<16xf32>
    %12 = vector.shape_cast %11 : vector<16xf32> to vector<16x1xf32>
    %cst_10 = arith.constant 3.200000e+01 : f32
    %13 = vector.broadcast %cst_10 : f32 to vector<16x1xf32>
    %14 = arith.divf %12, %13 : vector<16x1xf32>
    %15 = vector.broadcast %14 : vector<16x1xf32> to vector<16x32xf32>
    %16 = arith.subf %8, %15 : vector<16x32xf32>
    %17 = arith.mulf %16, %16 : vector<16x32xf32>
    %cst_11 = arith.constant dense<0.000000e+00> : vector<16xf32>
    %18 = vector.multi_reduction <add>, %17, %cst_11 [1] : vector<16x32xf32> to vector<16xf32>
    %19 = vector.shape_cast %18 : vector<16xf32> to vector<16x1xf32>
    %cst_12 = arith.constant 3.200000e+01 : f32
    %20 = vector.broadcast %cst_12 : f32 to vector<16x1xf32>
    %21 = arith.divf %19, %20 : vector<16x1xf32>
    %22 = vector.broadcast %14 : vector<16x1xf32> to vector<16x32xf32>
    %23 = arith.subf %8, %22 : vector<16x32xf32>
    %cst_13 = arith.constant 9.99999974E-6 : f32
    %24 = vector.broadcast %cst_13 : f32 to vector<16x1xf32>
    %25 = arith.addf %21, %24 : vector<16x1xf32>
    %26 = math.rsqrt %25 : vector<16x1xf32>
    %27 = vector.broadcast %26 : vector<16x1xf32> to vector<16x32xf32>
    %28 = arith.mulf %23, %27 : vector<16x32xf32>
    %29 = vector.broadcast %9 : vector<1x32xf32> to vector<16x32xf32>
    %30 = arith.mulf %28, %29 : vector<16x32xf32>
    %31 = vector.broadcast %10 : vector<1x32xf32> to vector<16x32xf32>
    %32 = arith.addf %30, %31 : vector<16x32xf32>
    %c0_14 = arith.constant 0 : index
    %c0_15 = arith.constant 0 : index
    %33 = vector.load %arg3[%c0_14, %c0_15] : memref<64x64xf32, #tpu.memory_space<vmem>>, vector<64x64xf32>
    %c0_16 = arith.constant 0 : index
    %c0_17 = arith.constant 0 : index
    %34 = vector.load %arg6[%c0_16, %c0_17] : memref<2x32xf32, #tpu.memory_space<vmem>>, vector<1x32xf32>
    %c0_18 = arith.constant 0 : index
    %c0_19 = arith.constant 0 : index
    %35 = vector.load %arg7[%c0_18, %c0_19] : memref<2x32xf32, #tpu.memory_space<vmem>>, vector<1x32xf32>
    %cst_20 = arith.constant dense<0.000000e+00> : vector<16xf32>
    %36 = vector.multi_reduction <add>, %32, %cst_20 [1] : vector<16x32xf32> to vector<16xf32>
    %37 = vector.shape_cast %36 : vector<16xf32> to vector<16x1xf32>
    %cst_21 = arith.constant 3.200000e+01 : f32
    %38 = vector.broadcast %cst_21 : f32 to vector<16x1xf32>
    %39 = arith.divf %37, %38 : vector<16x1xf32>
    %40 = vector.broadcast %39 : vector<16x1xf32> to vector<16x32xf32>
    %41 = arith.subf %32, %40 : vector<16x32xf32>
    %42 = arith.mulf %41, %41 : vector<16x32xf32>
    %cst_22 = arith.constant dense<0.000000e+00> : vector<16xf32>
    %43 = vector.multi_reduction <add>, %42, %cst_22 [1] : vector<16x32xf32> to vector<16xf32>
    %44 = vector.shape_cast %43 : vector<16xf32> to vector<16x1xf32>
    %cst_23 = arith.constant 3.200000e+01 : f32
    %45 = vector.broadcast %cst_23 : f32 to vector<16x1xf32>
    %46 = arith.divf %44, %45 : vector<16x1xf32>
    %47 = vector.broadcast %39 : vector<16x1xf32> to vector<16x32xf32>
    %48 = arith.subf %32, %47 : vector<16x32xf32>
    %cst_24 = arith.constant 9.99999974E-6 : f32
    %49 = vector.broadcast %cst_24 : f32 to vector<16x1xf32>
    %50 = arith.addf %46, %49 : vector<16x1xf32>
    %51 = math.rsqrt %50 : vector<16x1xf32>
    %52 = vector.broadcast %51 : vector<16x1xf32> to vector<16x32xf32>
    %53 = arith.mulf %48, %52 : vector<16x32xf32>
    %54 = vector.broadcast %34 : vector<1x32xf32> to vector<16x32xf32>
    %55 = arith.mulf %53, %54 : vector<16x32xf32>
    %56 = vector.broadcast %35 : vector<1x32xf32> to vector<16x32xf32>
    %57 = arith.addf %55, %56 : vector<16x32xf32>
    %58 = arith.truncf %57 : vector<16x32xf32> to vector<16x32xbf16>
    %c0_25 = arith.constant 0 : index
    %c0_26 = arith.constant 0 : index
    %c0_27 = arith.constant 0 : index
    %59 = vector.load %arg8[%c0_25, %c0_26, %c0_27] : memref<2x32x96xbf16, #tpu.memory_space<vmem>>, vector<1x32x96xbf16>
    %60 = vector.shape_cast %59 : vector<1x32x96xbf16> to vector<32x96xbf16>
    %cst_28 = arith.constant dense<0.000000e+00> : vector<16x96xf32>
    %61 = tpu.matmul %58, %60, %cst_28 {dimension_numbers = #tpu.dot_dimension_numbers<[1], [0], [0], [1], [0, 0, 1, 1], [], []>} : vector<16x32xbf16>, vector<32x96xbf16>, vector<16x96xf32> -> vector<16x96xf32>
    %c0_29 = arith.constant 0 : index
    %c0_30 = arith.constant 0 : index
    %62 = vector.load %arg9[%c0_29, %c0_30] : memref<2x96xf32, #tpu.memory_space<vmem>>, vector<1x96xf32>
    %63 = vector.broadcast %62 : vector<1x96xf32> to vector<16x96xf32>
    %64 = arith.addf %61, %63 : vector<16x96xf32>
    %65 = vector.extract_strided_slice %64 {offsets = [0, 0], sizes = [16, 8], strides = [1, 1]} : vector<16x96xf32> to vector<16x8xf32>
    %66 = vector.extract_strided_slice %64 {offsets = [0, 8], sizes = [16, 8], strides = [1, 1]} : vector<16x96xf32> to vector<16x8xf32>
    %67 = vector.extract_strided_slice %64 {offsets = [0, 16], sizes = [16, 8], strides = [1, 1]} : vector<16x96xf32> to vector<16x8xf32>
    %68 = vector.extract_strided_slice %64 {offsets = [0, 24], sizes = [16, 8], strides = [1, 1]} : vector<16x96xf32> to vector<16x8xf32>
    %69 = tpu.concatenate %65, %66, %67, %68 in 0 : vector<16x8xf32>, vector<16x8xf32>, vector<16x8xf32>, vector<16x8xf32> -> vector<64x8xf32>
    %70 = vector.extract_strided_slice %64 {offsets = [0, 32], sizes = [16, 8], strides = [1, 1]} : vector<16x96xf32> to vector<16x8xf32>
    %71 = vector.extract_strided_slice %64 {offsets = [0, 40], sizes = [16, 8], strides = [1, 1]} : vector<16x96xf32> to vector<16x8xf32>
    %72 = vector.extract_strided_slice %64 {offsets = [0, 48], sizes = [16, 8], strides = [1, 1]} : vector<16x96xf32> to vector<16x8xf32>
    %73 = vector.extract_strided_slice %64 {offsets = [0, 56], sizes = [16, 8], strides = [1, 1]} : vector<16x96xf32> to vector<16x8xf32>
    %74 = tpu.concatenate %70, %71, %72, %73 in 0 : vector<16x8xf32>, vector<16x8xf32>, vector<16x8xf32>, vector<16x8xf32> -> vector<64x8xf32>
    %75 = vector.extract_strided_slice %64 {offsets = [0, 64], sizes = [16, 8], strides = [1, 1]} : vector<16x96xf32> to vector<16x8xf32>
    %76 = vector.extract_strided_slice %64 {offsets = [0, 72], sizes = [16, 8], strides = [1, 1]} : vector<16x96xf32> to vector<16x8xf32>
    %77 = vector.extract_strided_slice %64 {offsets = [0, 80], sizes = [16, 8], strides = [1, 1]} : vector<16x96xf32> to vector<16x8xf32>
    %78 = vector.extract_strided_slice %64 {offsets = [0, 88], sizes = [16, 8], strides = [1, 1]} : vector<16x96xf32> to vector<16x8xf32>
    %79 = tpu.concatenate %75, %76, %77, %78 in 0 : vector<16x8xf32>, vector<16x8xf32>, vector<16x8xf32>, vector<16x8xf32> -> vector<64x8xf32>
    %80 = arith.truncf %69 : vector<64x8xf32> to vector<64x8xbf16>
    %81 = arith.truncf %74 : vector<64x8xf32> to vector<64x8xbf16>
    %cst_31 = arith.constant dense<0.000000e+00> : vector<64x64xf32>
    %82 = tpu.matmul %80, %81, %cst_31 {dimension_numbers = #tpu.dot_dimension_numbers<[1], [1], [0], [0], [0, 0, 1, 0], [], []>} : vector<64x8xbf16>, vector<64x8xbf16>, vector<64x64xf32> -> vector<64x64xf32>
    %83 = arith.addf %82, %33 : vector<64x64xf32>
    %cst_32 = arith.constant dense<0xFF800000> : vector<64xf32>
    %84 = vector.multi_reduction <maximumf>, %83, %cst_32 [1] : vector<64x64xf32> to vector<64xf32>
    %85 = vector.shape_cast %84 : vector<64xf32> to vector<64x1xf32>
    %86 = vector.broadcast %85 : vector<64x1xf32> to vector<64x64xf32>
    %87 = arith.subf %83, %86 : vector<64x64xf32>
    %88 = math.exp %87 : vector<64x64xf32>
    %cst_33 = arith.constant dense<0.000000e+00> : vector<64xf32>
    %89 = vector.multi_reduction <add>, %88, %cst_33 [1] : vector<64x64xf32> to vector<64xf32>
    %90 = vector.shape_cast %89 : vector<64xf32> to vector<64x1xf32>
    %91 = tpu.reciprocal %90 {approx = true} : vector<64x1xf32> -> vector<64x1xf32>
    %92 = vector.broadcast %91 : vector<64x1xf32> to vector<64x64xf32>
    %93 = arith.mulf %88, %92 : vector<64x64xf32>
    %94 = arith.truncf %93 : vector<64x64xf32> to vector<64x64xbf16>
    %95 = arith.truncf %79 : vector<64x8xf32> to vector<64x8xbf16>
    %cst_34 = arith.constant dense<0.000000e+00> : vector<64x8xf32>
    %96 = tpu.matmul %94, %95, %cst_34 {dimension_numbers = #tpu.dot_dimension_numbers<[1], [0], [0], [1], [0, 0, 1, 1], [], []>} : vector<64x64xbf16>, vector<64x8xbf16>, vector<64x8xf32> -> vector<64x8xf32>
    %97 = vector.extract_strided_slice %96 {offsets = [0, 0], sizes = [16, 8], strides = [1, 1]} : vector<64x8xf32> to vector<16x8xf32>
    %98 = vector.extract_strided_slice %96 {offsets = [16, 0], sizes = [16, 8], strides = [1, 1]} : vector<64x8xf32> to vector<16x8xf32>
    %99 = vector.extract_strided_slice %96 {offsets = [32, 0], sizes = [16, 8], strides = [1, 1]} : vector<64x8xf32> to vector<16x8xf32>
    %100 = vector.extract_strided_slice %96 {offsets = [48, 0], sizes = [16, 8], strides = [1, 1]} : vector<64x8xf32> to vector<16x8xf32>
    %101 = tpu.concatenate %97, %98, %99, %100 in 1 : vector<16x8xf32>, vector<16x8xf32>, vector<16x8xf32>, vector<16x8xf32> -> vector<16x32xf32>
    %102 = arith.truncf %101 : vector<16x32xf32> to vector<16x32xbf16>
    %c0_35 = arith.constant 0 : index
    %c0_36 = arith.constant 0 : index
    %c0_37 = arith.constant 0 : index
    %103 = vector.load %arg10[%c0_35, %c0_36, %c0_37] : memref<2x32x32xbf16, #tpu.memory_space<vmem>>, vector<1x32x32xbf16>
    %104 = vector.shape_cast %103 : vector<1x32x32xbf16> to vector<32x32xbf16>
    %cst_38 = arith.constant dense<0.000000e+00> : vector<16x32xf32>
    %105 = tpu.matmul %102, %104, %cst_38 {dimension_numbers = #tpu.dot_dimension_numbers<[1], [0], [0], [1], [0, 0, 1, 1], [], []>} : vector<16x32xbf16>, vector<32x32xbf16>, vector<16x32xf32> -> vector<16x32xf32>
    %c0_39 = arith.constant 0 : index
    %c0_40 = arith.constant 0 : index
    %106 = vector.load %arg11[%c0_39, %c0_40] : memref<2x32xf32, #tpu.memory_space<vmem>>, vector<1x32xf32>
    %107 = vector.broadcast %106 : vector<1x32xf32> to vector<16x32xf32>
    %108 = arith.addf %105, %107 : vector<16x32xf32>
    %109 = arith.addf %32, %108 : vector<16x32xf32>
    %c0_41 = arith.constant 0 : index
    %c0_42 = arith.constant 0 : index
    %110 = vector.load %arg12[%c0_41, %c0_42] : memref<2x32xf32, #tpu.memory_space<vmem>>, vector<1x32xf32>
    %c0_43 = arith.constant 0 : index
    %c0_44 = arith.constant 0 : index
    %111 = vector.load %arg13[%c0_43, %c0_44] : memref<2x32xf32, #tpu.memory_space<vmem>>, vector<1x32xf32>
    %cst_45 = arith.constant dense<0.000000e+00> : vector<16xf32>
    %112 = vector.multi_reduction <add>, %109, %cst_45 [1] : vector<16x32xf32> to vector<16xf32>
    %113 = vector.shape_cast %112 : vector<16xf32> to vector<16x1xf32>
    %cst_46 = arith.constant 3.200000e+01 : f32
    %114 = vector.broadcast %cst_46 : f32 to vector<16x1xf32>
    %115 = arith.divf %113, %114 : vector<16x1xf32>
    %116 = vector.broadcast %115 : vector<16x1xf32> to vector<16x32xf32>
    %117 = arith.subf %109, %116 : vector<16x32xf32>
    %118 = arith.mulf %117, %117 : vector<16x32xf32>
    %cst_47 = arith.constant dense<0.000000e+00> : vector<16xf32>
    %119 = vector.multi_reduction <add>, %118, %cst_47 [1] : vector<16x32xf32> to vector<16xf32>
    %120 = vector.shape_cast %119 : vector<16xf32> to vector<16x1xf32>
    %cst_48 = arith.constant 3.200000e+01 : f32
    %121 = vector.broadcast %cst_48 : f32 to vector<16x1xf32>
    %122 = arith.divf %120, %121 : vector<16x1xf32>
    %123 = vector.broadcast %115 : vector<16x1xf32> to vector<16x32xf32>
    %124 = arith.subf %109, %123 : vector<16x32xf32>
    %cst_49 = arith.constant 9.99999974E-6 : f32
    %125 = vector.broadcast %cst_49 : f32 to vector<16x1xf32>
    %126 = arith.addf %122, %125 : vector<16x1xf32>
    %127 = math.rsqrt %126 : vector<16x1xf32>
    %128 = vector.broadcast %127 : vector<16x1xf32> to vector<16x32xf32>
    %129 = arith.mulf %124, %128 : vector<16x32xf32>
    %130 = vector.broadcast %110 : vector<1x32xf32> to vector<16x32xf32>
    %131 = arith.mulf %129, %130 : vector<16x32xf32>
    %132 = vector.broadcast %111 : vector<1x32xf32> to vector<16x32xf32>
    %133 = arith.addf %131, %132 : vector<16x32xf32>
    %134 = arith.truncf %133 : vector<16x32xf32> to vector<16x32xbf16>
    %c0_50 = arith.constant 0 : index
    %c0_51 = arith.constant 0 : index
    %c0_52 = arith.constant 0 : index
    %135 = vector.load %arg14[%c0_50, %c0_51, %c0_52] : memref<2x32x128xbf16, #tpu.memory_space<vmem>>, vector<1x32x128xbf16>
    %136 = vector.shape_cast %135 : vector<1x32x128xbf16> to vector<32x128xbf16>
    %cst_53 = arith.constant dense<0.000000e+00> : vector<16x128xf32>
    %137 = tpu.matmul %134, %136, %cst_53 {dimension_numbers = #tpu.dot_dimension_numbers<[1], [0], [0], [1], [0, 0, 1, 1], [], []>} : vector<16x32xbf16>, vector<32x128xbf16>, vector<16x128xf32> -> vector<16x128xf32>
    %c0_54 = arith.constant 0 : index
    %c0_55 = arith.constant 0 : index
    %138 = vector.load %arg15[%c0_54, %c0_55] : memref<2x128xf32, #tpu.memory_space<vmem>>, vector<1x128xf32>
    %139 = vector.broadcast %138 : vector<1x128xf32> to vector<16x128xf32>
    %140 = arith.addf %137, %139 : vector<16x128xf32>
    %cst_56 = arith.constant 1.702000e+00 : f32
    %141 = vector.broadcast %cst_56 : f32 to vector<16x128xf32>
    %142 = arith.mulf %141, %140 : vector<16x128xf32>
    %143 = arith.negf %142 : vector<16x128xf32>
    %144 = math.exp %143 : vector<16x128xf32>
    %cst_57 = arith.constant 1.000000e+00 : f32
    %145 = vector.broadcast %cst_57 : f32 to vector<16x128xf32>
    %146 = arith.addf %145, %144 : vector<16x128xf32>
    %147 = arith.divf %145, %146 : vector<16x128xf32>
    %148 = arith.mulf %140, %147 : vector<16x128xf32>
    %149 = arith.truncf %148 : vector<16x128xf32> to vector<16x128xbf16>
    %c0_58 = arith.constant 0 : index
    %c0_59 = arith.constant 0 : index
    %c0_60 = arith.constant 0 : index
    %150 = vector.load %arg16[%c0_58, %c0_59, %c0_60] : memref<2x128x32xbf16, #tpu.memory_space<vmem>>, vector<1x128x32xbf16>
    %151 = vector.shape_cast %150 : vector<1x128x32xbf16> to vector<128x32xbf16>
    %cst_61 = arith.constant dense<0.000000e+00> : vector<16x32xf32>
    %152 = tpu.matmul %149, %151, %cst_61 {dimension_numbers = #tpu.dot_dimension_numbers<[1], [0], [0], [1], [0, 0, 1, 1], [], []>} : vector<16x128xbf16>, vector<128x32xbf16>, vector<16x32xf32> -> vector<16x32xf32>
    %c0_62 = arith.constant 0 : index
    %c0_63 = arith.constant 0 : index
    %153 = vector.load %arg17[%c0_62, %c0_63] : memref<2x32xf32, #tpu.memory_space<vmem>>, vector<1x32xf32>
    %154 = vector.broadcast %153 : vector<1x32xf32> to vector<16x32xf32>
    %155 = arith.addf %152, %154 : vector<16x32xf32>
    %156 = arith.addf %109, %155 : vector<16x32xf32>
    %c1 = arith.constant 1 : index
    %c0_64 = arith.constant 0 : index
    %157 = vector.load %arg6[%c1, %c0_64] : memref<2x32xf32, #tpu.memory_space<vmem>>, vector<1x32xf32>
    %c1_65 = arith.constant 1 : index
    %c0_66 = arith.constant 0 : index
    %158 = vector.load %arg7[%c1_65, %c0_66] : memref<2x32xf32, #tpu.memory_space<vmem>>, vector<1x32xf32>
    %cst_67 = arith.constant dense<0.000000e+00> : vector<16xf32>
    %159 = vector.multi_reduction <add>, %156, %cst_67 [1] : vector<16x32xf32> to vector<16xf32>
    %160 = vector.shape_cast %159 : vector<16xf32> to vector<16x1xf32>
    %cst_68 = arith.constant 3.200000e+01 : f32
    %161 = vector.broadcast %cst_68 : f32 to vector<16x1xf32>
    %162 = arith.divf %160, %161 : vector<16x1xf32>
    %163 = vector.broadcast %162 : vector<16x1xf32> to vector<16x32xf32>
    %164 = arith.subf %156, %163 : vector<16x32xf32>
    %165 = arith.mulf %164, %164 : vector<16x32xf32>
    %cst_69 = arith.constant dense<0.000000e+00> : vector<16xf32>
    %166 = vector.multi_reduction <add>, %165, %cst_69 [1] : vector<16x32xf32> to vector<16xf32>
    %167 = vector.shape_cast %166 : vector<16xf32> to vector<16x1xf32>
    %cst_70 = arith.constant 3.200000e+01 : f32
    %168 = vector.broadcast %cst_70 : f32 to vector<16x1xf32>
    %169 = arith.divf %167, %168 : vector<16x1xf32>
    %170 = vector.broadcast %162 : vector<16x1xf32> to vector<16x32xf32>
    %171 = arith.subf %156, %170 : vector<16x32xf32>
    %cst_71 = arith.constant 9.99999974E-6 : f32
    %172 = vector.broadcast %cst_71 : f32 to vector<16x1xf32>
    %173 = arith.addf %169, %172 : vector<16x1xf32>
    %174 = math.rsqrt %173 : vector<16x1xf32>
    %175 = vector.broadcast %174 : vector<16x1xf32> to vector<16x32xf32>
    %176 = arith.mulf %171, %175 : vector<16x32xf32>
    %177 = vector.broadcast %157 : vector<1x32xf32> to vector<16x32xf32>
    %178 = arith.mulf %176, %177 : vector<16x32xf32>
    %179 = vector.broadcast %158 : vector<1x32xf32> to vector<16x32xf32>
    %180 = arith.addf %178, %179 : vector<16x32xf32>
    %181 = arith.truncf %180 : vector<16x32xf32> to vector<16x32xbf16>
    %c1_72 = arith.constant 1 : index
    %c0_73 = arith.constant 0 : index
    %c0_74 = arith.constant 0 : index
    %182 = vector.load %arg8[%c1_72, %c0_73, %c0_74] : memref<2x32x96xbf16, #tpu.memory_space<vmem>>, vector<1x32x96xbf16>
    %183 = vector.shape_cast %182 : vector<1x32x96xbf16> to vector<32x96xbf16>
    %cst_75 = arith.constant dense<0.000000e+00> : vector<16x96xf32>
    %184 = tpu.matmul %181, %183, %cst_75 {dimension_numbers = #tpu.dot_dimension_numbers<[1], [0], [0], [1], [0, 0, 1, 1], [], []>} : vector<16x32xbf16>, vector<32x96xbf16>, vector<16x96xf32> -> vector<16x96xf32>
    %c1_76 = arith.constant 1 : index
    %c0_77 = arith.constant 0 : index
    %185 = vector.load %arg9[%c1_76, %c0_77] : memref<2x96xf32, #tpu.memory_space<vmem>>, vector<1x96xf32>
    %186 = vector.broadcast %185 : vector<1x96xf32> to vector<16x96xf32>
    %187 = arith.addf %184, %186 : vector<16x96xf32>
    %188 = vector.extract_strided_slice %187 {offsets = [0, 0], sizes = [16, 8], strides = [1, 1]} : vector<16x96xf32> to vector<16x8xf32>
    %189 = vector.extract_strided_slice %187 {offsets = [0, 8], sizes = [16, 8], strides = [1, 1]} : vector<16x96xf32> to vector<16x8xf32>
    %190 = vector.extract_strided_slice %187 {offsets = [0, 16], sizes = [16, 8], strides = [1, 1]} : vector<16x96xf32> to vector<16x8xf32>
    %191 = vector.extract_strided_slice %187 {offsets = [0, 24], sizes = [16, 8], strides = [1, 1]} : vector<16x96xf32> to vector<16x8xf32>
    %192 = tpu.concatenate %188, %189, %190, %191 in 0 : vector<16x8xf32>, vector<16x8xf32>, vector<16x8xf32>, vector<16x8xf32> -> vector<64x8xf32>
    %193 = vector.extract_strided_slice %187 {offsets = [0, 32], sizes = [16, 8], strides = [1, 1]} : vector<16x96xf32> to vector<16x8xf32>
    %194 = vector.extract_strided_slice %187 {offsets = [0, 40], sizes = [16, 8], strides = [1, 1]} : vector<16x96xf32> to vector<16x8xf32>
    %195 = vector.extract_strided_slice %187 {offsets = [0, 48], sizes = [16, 8], strides = [1, 1]} : vector<16x96xf32> to vector<16x8xf32>
    %196 = vector.extract_strided_slice %187 {offsets = [0, 56], sizes = [16, 8], strides = [1, 1]} : vector<16x96xf32> to vector<16x8xf32>
    %197 = tpu.concatenate %193, %194, %195, %196 in 0 : vector<16x8xf32>, vector<16x8xf32>, vector<16x8xf32>, vector<16x8xf32> -> vector<64x8xf32>
    %198 = vector.extract_strided_slice %187 {offsets = [0, 64], sizes = [16, 8], strides = [1, 1]} : vector<16x96xf32> to vector<16x8xf32>
    %199 = vector.extract_strided_slice %187 {offsets = [0, 72], sizes = [16, 8], strides = [1, 1]} : vector<16x96xf32> to vector<16x8xf32>
    %200 = vector.extract_strided_slice %187 {offsets = [0, 80], sizes = [16, 8], strides = [1, 1]} : vector<16x96xf32> to vector<16x8xf32>
    %201 = vector.extract_strided_slice %187 {offsets = [0, 88], sizes = [16, 8], strides = [1, 1]} : vector<16x96xf32> to vector<16x8xf32>
    %202 = tpu.concatenate %198, %199, %200, %201 in 0 : vector<16x8xf32>, vector<16x8xf32>, vector<16x8xf32>, vector<16x8xf32> -> vector<64x8xf32>
    %203 = arith.truncf %192 : vector<64x8xf32> to vector<64x8xbf16>
    %204 = arith.truncf %197 : vector<64x8xf32> to vector<64x8xbf16>
    %cst_78 = arith.constant dense<0.000000e+00> : vector<64x64xf32>
    %205 = tpu.matmul %203, %204, %cst_78 {dimension_numbers = #tpu.dot_dimension_numbers<[1], [1], [0], [0], [0, 0, 1, 0], [], []>} : vector<64x8xbf16>, vector<64x8xbf16>, vector<64x64xf32> -> vector<64x64xf32>
    %206 = arith.addf %205, %33 : vector<64x64xf32>
    %cst_79 = arith.constant dense<0xFF800000> : vector<64xf32>
    %207 = vector.multi_reduction <maximumf>, %206, %cst_79 [1] : vector<64x64xf32> to vector<64xf32>
    %208 = vector.shape_cast %207 : vector<64xf32> to vector<64x1xf32>
    %209 = vector.broadcast %208 : vector<64x1xf32> to vector<64x64xf32>
    %210 = arith.subf %206, %209 : vector<64x64xf32>
    %211 = math.exp %210 : vector<64x64xf32>
    %cst_80 = arith.constant dense<0.000000e+00> : vector<64xf32>
    %212 = vector.multi_reduction <add>, %211, %cst_80 [1] : vector<64x64xf32> to vector<64xf32>
    %213 = vector.shape_cast %212 : vector<64xf32> to vector<64x1xf32>
    %214 = tpu.reciprocal %213 {approx = true} : vector<64x1xf32> -> vector<64x1xf32>
    %215 = vector.broadcast %214 : vector<64x1xf32> to vector<64x64xf32>
    %216 = arith.mulf %211, %215 : vector<64x64xf32>
    %217 = arith.truncf %216 : vector<64x64xf32> to vector<64x64xbf16>
    %218 = arith.truncf %202 : vector<64x8xf32> to vector<64x8xbf16>
    %cst_81 = arith.constant dense<0.000000e+00> : vector<64x8xf32>
    %219 = tpu.matmul %217, %218, %cst_81 {dimension_numbers = #tpu.dot_dimension_numbers<[1], [0], [0], [1], [0, 0, 1, 1], [], []>} : vector<64x64xbf16>, vector<64x8xbf16>, vector<64x8xf32> -> vector<64x8xf32>
    %220 = vector.extract_strided_slice %219 {offsets = [0, 0], sizes = [16, 8], strides = [1, 1]} : vector<64x8xf32> to vector<16x8xf32>
    %221 = vector.extract_strided_slice %219 {offsets = [16, 0], sizes = [16, 8], strides = [1, 1]} : vector<64x8xf32> to vector<16x8xf32>
    %222 = vector.extract_strided_slice %219 {offsets = [32, 0], sizes = [16, 8], strides = [1, 1]} : vector<64x8xf32> to vector<16x8xf32>
    %223 = vector.extract_strided_slice %219 {offsets = [48, 0], sizes = [16, 8], strides = [1, 1]} : vector<64x8xf32> to vector<16x8xf32>
    %224 = tpu.concatenate %220, %221, %222, %223 in 1 : vector<16x8xf32>, vector<16x8xf32>, vector<16x8xf32>, vector<16x8xf32> -> vector<16x32xf32>
    %225 = arith.truncf %224 : vector<16x32xf32> to vector<16x32xbf16>
    %c1_82 = arith.constant 1 : index
    %c0_83 = arith.constant 0 : index
    %c0_84 = arith.constant 0 : index
    %226 = vector.load %arg10[%c1_82, %c0_83, %c0_84] : memref<2x32x32xbf16, #tpu.memory_space<vmem>>, vector<1x32x32xbf16>
    %227 = vector.shape_cast %226 : vector<1x32x32xbf16> to vector<32x32xbf16>
    %cst_85 = arith.constant dense<0.000000e+00> : vector<16x32xf32>
    %228 = tpu.matmul %225, %227, %cst_85 {dimension_numbers = #tpu.dot_dimension_numbers<[1], [0], [0], [1], [0, 0, 1, 1], [], []>} : vector<16x32xbf16>, vector<32x32xbf16>, vector<16x32xf32> -> vector<16x32xf32>
    %c1_86 = arith.constant 1 : index
    %c0_87 = arith.constant 0 : index
    %229 = vector.load %arg11[%c1_86, %c0_87] : memref<2x32xf32, #tpu.memory_space<vmem>>, vector<1x32xf32>
    %230 = vector.broadcast %229 : vector<1x32xf32> to vector<16x32xf32>
    %231 = arith.addf %228, %230 : vector<16x32xf32>
    %232 = arith.addf %156, %231 : vector<16x32xf32>
    %c1_88 = arith.constant 1 : index
    %c0_89 = arith.constant 0 : index
    %233 = vector.load %arg12[%c1_88, %c0_89] : memref<2x32xf32, #tpu.memory_space<vmem>>, vector<1x32xf32>
    %c1_90 = arith.constant 1 : index
    %c0_91 = arith.constant 0 : index
    %234 = vector.load %arg13[%c1_90, %c0_91] : memref<2x32xf32, #tpu.memory_space<vmem>>, vector<1x32xf32>
    %cst_92 = arith.constant dense<0.000000e+00> : vector<16xf32>
    %235 = vector.multi_reduction <add>, %232, %cst_92 [1] : vector<16x32xf32> to vector<16xf32>
    %236 = vector.shape_cast %235 : vector<16xf32> to vector<16x1xf32>
    %cst_93 = arith.constant 3.200000e+01 : f32
    %237 = vector.broadcast %cst_93 : f32 to vector<16x1xf32>
    %238 = arith.divf %236, %237 : vector<16x1xf32>
    %239 = vector.broadcast %238 : vector<16x1xf32> to vector<16x32xf32>
    %240 = arith.subf %232, %239 : vector<16x32xf32>
    %241 = arith.mulf %240, %240 : vector<16x32xf32>
    %cst_94 = arith.constant dense<0.000000e+00> : vector<16xf32>
    %242 = vector.multi_reduction <add>, %241, %cst_94 [1] : vector<16x32xf32> to vector<16xf32>
    %243 = vector.shape_cast %242 : vector<16xf32> to vector<16x1xf32>
    %cst_95 = arith.constant 3.200000e+01 : f32
    %244 = vector.broadcast %cst_95 : f32 to vector<16x1xf32>
    %245 = arith.divf %243, %244 : vector<16x1xf32>
    %246 = vector.broadcast %238 : vector<16x1xf32> to vector<16x32xf32>
    %247 = arith.subf %232, %246 : vector<16x32xf32>
    %cst_96 = arith.constant 9.99999974E-6 : f32
    %248 = vector.broadcast %cst_96 : f32 to vector<16x1xf32>
    %249 = arith.addf %245, %248 : vector<16x1xf32>
    %250 = math.rsqrt %249 : vector<16x1xf32>
    %251 = vector.broadcast %250 : vector<16x1xf32> to vector<16x32xf32>
    %252 = arith.mulf %247, %251 : vector<16x32xf32>
    %253 = vector.broadcast %233 : vector<1x32xf32> to vector<16x32xf32>
    %254 = arith.mulf %252, %253 : vector<16x32xf32>
    %255 = vector.broadcast %234 : vector<1x32xf32> to vector<16x32xf32>
    %256 = arith.addf %254, %255 : vector<16x32xf32>
    %257 = arith.truncf %256 : vector<16x32xf32> to vector<16x32xbf16>
    %c1_97 = arith.constant 1 : index
    %c0_98 = arith.constant 0 : index
    %c0_99 = arith.constant 0 : index
    %258 = vector.load %arg14[%c1_97, %c0_98, %c0_99] : memref<2x32x128xbf16, #tpu.memory_space<vmem>>, vector<1x32x128xbf16>
    %259 = vector.shape_cast %258 : vector<1x32x128xbf16> to vector<32x128xbf16>
    %cst_100 = arith.constant dense<0.000000e+00> : vector<16x128xf32>
    %260 = tpu.matmul %257, %259, %cst_100 {dimension_numbers = #tpu.dot_dimension_numbers<[1], [0], [0], [1], [0, 0, 1, 1], [], []>} : vector<16x32xbf16>, vector<32x128xbf16>, vector<16x128xf32> -> vector<16x128xf32>
    %c1_101 = arith.constant 1 : index
    %c0_102 = arith.constant 0 : index
    %261 = vector.load %arg15[%c1_101, %c0_102] : memref<2x128xf32, #tpu.memory_space<vmem>>, vector<1x128xf32>
    %262 = vector.broadcast %261 : vector<1x128xf32> to vector<16x128xf32>
    %263 = arith.addf %260, %262 : vector<16x128xf32>
    %cst_103 = arith.constant 1.702000e+00 : f32
    %264 = vector.broadcast %cst_103 : f32 to vector<16x128xf32>
    %265 = arith.mulf %264, %263 : vector<16x128xf32>
    %266 = arith.negf %265 : vector<16x128xf32>
    %267 = math.exp %266 : vector<16x128xf32>
    %cst_104 = arith.constant 1.000000e+00 : f32
    %268 = vector.broadcast %cst_104 : f32 to vector<16x128xf32>
    %269 = arith.addf %268, %267 : vector<16x128xf32>
    %270 = arith.divf %268, %269 : vector<16x128xf32>
    %271 = arith.mulf %263, %270 : vector<16x128xf32>
    %272 = arith.truncf %271 : vector<16x128xf32> to vector<16x128xbf16>
    %c1_105 = arith.constant 1 : index
    %c0_106 = arith.constant 0 : index
    %c0_107 = arith.constant 0 : index
    %273 = vector.load %arg16[%c1_105, %c0_106, %c0_107] : memref<2x128x32xbf16, #tpu.memory_space<vmem>>, vector<1x128x32xbf16>
    %274 = vector.shape_cast %273 : vector<1x128x32xbf16> to vector<128x32xbf16>
    %cst_108 = arith.constant dense<0.000000e+00> : vector<16x32xf32>
    %275 = tpu.matmul %272, %274, %cst_108 {dimension_numbers = #tpu.dot_dimension_numbers<[1], [0], [0], [1], [0, 0, 1, 1], [], []>} : vector<16x128xbf16>, vector<128x32xbf16>, vector<16x32xf32> -> vector<16x32xf32>
    %c1_109 = arith.constant 1 : index
    %c0_110 = arith.constant 0 : index
    %276 = vector.load %arg17[%c1_109, %c0_110] : memref<2x32xf32, #tpu.memory_space<vmem>>, vector<1x32xf32>
    %277 = vector.broadcast %276 : vector<1x32xf32> to vector<16x32xf32>
    %278 = arith.addf %275, %277 : vector<16x32xf32>
    %279 = arith.addf %232, %278 : vector<16x32xf32>
    %280 = vector.shape_cast %279 : vector<16x32xf32> to vector<2x8x32xf32>
    %281 = vector.extract_strided_slice %280 {offsets = [0, 0, 0], sizes = [2, 1, 32], strides = [1, 1, 1]} : vector<2x8x32xf32> to vector<2x1x32xf32>
    %282 = vector.shape_cast %281 : vector<2x1x32xf32> to vector<2x32xf32>
    %c0_111 = arith.constant 0 : index
    %c0_112 = arith.constant 0 : index
    %283 = vector.load %arg18[%c0_111, %c0_112] : memref<1x32xf32, #tpu.memory_space<vmem>>, vector<1x32xf32>
    %c0_113 = arith.constant 0 : index
    %c0_114 = arith.constant 0 : index
    %284 = vector.load %arg19[%c0_113, %c0_114] : memref<1x32xf32, #tpu.memory_space<vmem>>, vector<1x32xf32>
    %cst_115 = arith.constant dense<0.000000e+00> : vector<2xf32>
    %285 = vector.multi_reduction <add>, %282, %cst_115 [1] : vector<2x32xf32> to vector<2xf32>
    %286 = vector.shape_cast %285 : vector<2xf32> to vector<2x1xf32>
    %cst_116 = arith.constant 3.200000e+01 : f32
    %287 = vector.broadcast %cst_116 : f32 to vector<2x1xf32>
    %288 = arith.divf %286, %287 : vector<2x1xf32>
    %289 = vector.broadcast %288 : vector<2x1xf32> to vector<2x32xf32>
    %290 = arith.subf %282, %289 : vector<2x32xf32>
    %291 = arith.mulf %290, %290 : vector<2x32xf32>
    %cst_117 = arith.constant dense<0.000000e+00> : vector<2xf32>
    %292 = vector.multi_reduction <add>, %291, %cst_117 [1] : vector<2x32xf32> to vector<2xf32>
    %293 = vector.shape_cast %292 : vector<2xf32> to vector<2x1xf32>
    %cst_118 = arith.constant 3.200000e+01 : f32
    %294 = vector.broadcast %cst_118 : f32 to vector<2x1xf32>
    %295 = arith.divf %293, %294 : vector<2x1xf32>
    %296 = vector.broadcast %288 : vector<2x1xf32> to vector<2x32xf32>
    %297 = arith.subf %282, %296 : vector<2x32xf32>
    %cst_119 = arith.constant 9.99999974E-6 : f32
    %298 = vector.broadcast %cst_119 : f32 to vector<2x1xf32>
    %299 = arith.addf %295, %298 : vector<2x1xf32>
    %300 = math.rsqrt %299 : vector<2x1xf32>
    %301 = vector.broadcast %300 : vector<2x1xf32> to vector<2x32xf32>
    %302 = arith.mulf %297, %301 : vector<2x32xf32>
    %303 = vector.broadcast %283 : vector<1x32xf32> to vector<2x32xf32>
    %304 = arith.mulf %302, %303 : vector<2x32xf32>
    %305 = vector.broadcast %284 : vector<1x32xf32> to vector<2x32xf32>
    %306 = arith.addf %304, %305 : vector<2x32xf32>
    %307 = arith.truncf %306 : vector<2x32xf32> to vector<2x32xbf16>
    %c0_120 = arith.constant 0 : index
    %c0_121 = arith.constant 0 : index
    %308 = vector.load %arg20[%c0_120, %c0_121] : memref<32x16xbf16, #tpu.memory_space<vmem>>, vector<32x16xbf16>
    %cst_122 = arith.constant dense<0.000000e+00> : vector<2x16xf32>
    %309 = tpu.matmul %307, %308, %cst_122 {dimension_numbers = #tpu.dot_dimension_numbers<[1], [0], [0], [1], [0, 0, 1, 1], [], []>} : vector<2x32xbf16>, vector<32x16xbf16>, vector<2x16xf32> -> vector<2x16xf32>
    %c0_123 = arith.constant 0 : index
    %c0_124 = arith.constant 0 : index
    %310 = vector.load %arg21[%c0_123, %c0_124] : memref<2x16xf32, #tpu.memory_space<vmem>>, vector<2x16xf32>
    tpu.vector_store %arg21[%c0_123, %c0_124], %309 {strides = array<i32>} : memref<2x16xf32, #tpu.memory_space<vmem>>, vector<2x16xf32>,
    return
  }
}

</mosaic_0001>

<llo_original>
// kernel: tpu_custom_call.1
$region0: #{tpu_custom_call.1}
  #allocation0 [shape = 'u32[]', space=smem, size = 0x4, offset = 0x4, fixed_abs, tag = 'smem constant byte address 0x4 - core index']
  #allocation1 [shape = 'u32[144,128]{1,0:T(1,128)}', space=vmem, size = 0x12000, scoped, tag = 'internal scratch']
  %s0 = inlined_call_operand.vmem [shape: bf16[16,256], index: 0, kind: input, shape index: {}]
  %s1 = inlined_call_operand.vmem [shape: bf16[256,32], index: 1, kind: input, shape index: {}]
  %s2 = inlined_call_operand.vmem [shape: f32[8,32], index: 2, kind: input, shape index: {}]
  %s3 = inlined_call_operand.vmem [shape: f32[64,64], index: 3, kind: input, shape index: {}]
  %s4 = inlined_call_operand.vmem [shape: f32[1,32], index: 4, kind: input, shape index: {}]
  %s5 = inlined_call_operand.vmem [shape: f32[1,32], index: 5, kind: input, shape index: {}]
  %s6 = inlined_call_operand.vmem [shape: f32[2,32], index: 6, kind: input, shape index: {}]
  %s7 = inlined_call_operand.vmem [shape: f32[2,32], index: 7, kind: input, shape index: {}]
  %s8 = inlined_call_operand.vmem [shape: bf16[2,32,96], index: 8, kind: input, shape index: {}]
  %s9 = inlined_call_operand.vmem [shape: f32[2,96], index: 9, kind: input, shape index: {}]
  %s10 = inlined_call_operand.vmem [shape: bf16[2,32,32], index: 10, kind: input, shape index: {}]
  %s11 = inlined_call_operand.vmem [shape: f32[2,32], index: 11, kind: input, shape index: {}]
  %s12 = inlined_call_operand.vmem [shape: f32[2,32], index: 12, kind: input, shape index: {}]
  %s13 = inlined_call_operand.vmem [shape: f32[2,32], index: 13, kind: input, shape index: {}]
  %s14 = inlined_call_operand.vmem [shape: bf16[2,32,128], index: 14, kind: input, shape index: {}]
  %s15 = inlined_call_operand.vmem [shape: f32[2,128], index: 15, kind: input, shape index: {}]
  %s16 = inlined_call_operand.vmem [shape: bf16[2,128,32], index: 16, kind: input, shape index: {}]
  %s17 = inlined_call_operand.vmem [shape: f32[2,32], index: 17, kind: input, shape index: {}]
  %s18 = inlined_call_operand.vmem [shape: f32[1,32], index: 18, kind: input, shape index: {}]
  %s19 = inlined_call_operand.vmem [shape: f32[1,32], index: 19, kind: input, shape index: {}]
  %s20 = inlined_call_operand.vmem [shape: bf16[32,16], index: 20, kind: input, shape index: {}]
  %s21 = inlined_call_operand.hbm [shape: f32[2,16], index: 21, kind: output, shape index: {}]
  %s22 = sld [smem:[#allocation0]]
  $region94: #{tpu_custom_call.1} parent=0
    _
  %s24 = ssub.s32 1, %s22
  %s25 = scalar_select 0, %s24, %s22
  $region1: #{tpu_custom_call.1} parent=0
    #allocation2 [shape = 'u8[1024]{0}', space=vmem, size = 0x400, scoped, tag = 'output window, operand 0, single buffered']
    #allocation3 [shape = 's32[1]{0}', space=sflag, size = 0x4, scoped, tag = 'scoped memory for tpu_custom_call.1']
    %26 = vsyncpa [#allocation3], 0
    // Predicated region
    $region2: #{tpu_custom_call.1} parent=1 // pred_check
      _
    $region3: #{tpu_custom_call.1} parent=1 // pred_check_branch
      %28 = sbr.rel (0) target = $region5
    $region4: #{tpu_custom_call.1} parent=1 // pred_region
      _
    $region5: #{tpu_custom_call.1} parent=1 // pred_fallthru
      _
    // Predicated region
    $region6: #{tpu_custom_call.1} parent=1 // pred_check
      _
    $region7: #{tpu_custom_call.1} parent=1 // pred_check_branch
      %30 = sbr.rel (0) target = $region9
    $region8: #{tpu_custom_call.1} parent=1 // pred_region
      _
    $region9: #{tpu_custom_call.1} parent=1 // pred_fallthru
      _
    // Predicated region
    $region10: #{tpu_custom_call.1} parent=1 // pred_check
      _
    $region11: #{tpu_custom_call.1} parent=1 // pred_check_branch
      %32 = sbr.rel (0) target = $region13
    $region12: #{tpu_custom_call.1} parent=1 // pred_region
      _
    $region13: #{tpu_custom_call.1} parent=1 // pred_fallthru
      _
    // Predicated region
    $region14: #{tpu_custom_call.1} parent=1 // pred_check
      _
    $region15: #{tpu_custom_call.1} parent=1 // pred_check_branch
      %34 = sbr.rel (0) target = $region17
    $region16: #{tpu_custom_call.1} parent=1 // pred_region
      _
    $region17: #{tpu_custom_call.1} parent=1 // pred_fallthru
      _
    // Predicated region
    $region18: #{tpu_custom_call.1} parent=1 // pred_check
      _
    $region19: #{tpu_custom_call.1} parent=1 // pred_check_branch
      %36 = sbr.rel (0) target = $region21
    $region20: #{tpu_custom_call.1} parent=1 // pred_region
      _
    $region21: #{tpu_custom_call.1} parent=1 // pred_fallthru
      _
    // Predicated region
    $region22: #{tpu_custom_call.1} parent=1 // pred_check
      _
    $region23: #{tpu_custom_call.1} parent=1 // pred_check_branch
      %38 = sbr.rel (0) target = $region25
    $region24: #{tpu_custom_call.1} parent=1 // pred_region
      _
    $region25: #{tpu_custom_call.1} parent=1 // pred_fallthru
      _
    // Predicated region
    $region26: #{tpu_custom_call.1} parent=1 // pred_check
      _
    $region27: #{tpu_custom_call.1} parent=1 // pred_check_branch
      %40 = sbr.rel (0) target = $region29
    $region28: #{tpu_custom_call.1} parent=1 // pred_region
      _
    $region29: #{tpu_custom_call.1} parent=1 // pred_fallthru
      _
    // Predicated region
    $region30: #{tpu_custom_call.1} parent=1 // pred_check
      _
    $region31: #{tpu_custom_call.1} parent=1 // pred_check_branch
      %42 = sbr.rel (0) target = $region33
    $region32: #{tpu_custom_call.1} parent=1 // pred_region
      _
    $region33: #{tpu_custom_call.1} parent=1 // pred_fallthru
      _
    // Predicated region
    $region34: #{tpu_custom_call.1} parent=1 // pred_check
      _
    $region35: #{tpu_custom_call.1} parent=1 // pred_check_branch
      %44 = sbr.rel (0) target = $region37
    $region36: #{tpu_custom_call.1} parent=1 // pred_region
      _
    $region37: #{tpu_custom_call.1} parent=1 // pred_fallthru
      _
    // Predicated region
    $region38: #{tpu_custom_call.1} parent=1 // pred_check
      _
    $region39: #{tpu_custom_call.1} parent=1 // pred_check_branch
      %46 = sbr.rel (0) target = $region41
    $region40: #{tpu_custom_call.1} parent=1 // pred_region
      _
    $region41: #{tpu_custom_call.1} parent=1 // pred_fallthru
      _
    // Predicated region
    $region42: #{tpu_custom_call.1} parent=1 // pred_check
      _
    $region43: #{tpu_custom_call.1} parent=1 // pred_check_branch
      %48 = sbr.rel (0) target = $region45
    $region44: #{tpu_custom_call.1} parent=1 // pred_region
      _
    $region45: #{tpu_custom_call.1} parent=1 // pred_fallthru
      _
    // Predicated region
    $region46: #{tpu_custom_call.1} parent=1 // pred_check
      _
    $region47: #{tpu_custom_call.1} parent=1 // pred_check_branch
      %50 = sbr.rel (0) target = $region49
    $region48: #{tpu_custom_call.1} parent=1 // pred_region
      _
    $region49: #{tpu_custom_call.1} parent=1 // pred_fallthru
      _
    // Predicated region
    $region50: #{tpu_custom_call.1} parent=1 // pred_check
      _
    $region51: #{tpu_custom_call.1} parent=1 // pred_check_branch
      %52 = sbr.rel (0) target = $region53
    $region52: #{tpu_custom_call.1} parent=1 // pred_region
      _
    $region53: #{tpu_custom_call.1} parent=1 // pred_fallthru
      _
    // Predicated region
    $region54: #{tpu_custom_call.1} parent=1 // pred_check
      _
    $region55: #{tpu_custom_call.1} parent=1 // pred_check_branch
      %54 = sbr.rel (0) target = $region57
    $region56: #{tpu_custom_call.1} parent=1 // pred_region
      _
    $region57: #{tpu_custom_call.1} parent=1 // pred_fallthru
      _
    // Predicated region
    $region58: #{tpu_custom_call.1} parent=1 // pred_check
      _
    $region59: #{tpu_custom_call.1} parent=1 // pred_check_branch
      %56 = sbr.rel (0) target = $region61
    $region60: #{tpu_custom_call.1} parent=1 // pred_region
      _
    $region61: #{tpu_custom_call.1} parent=1 // pred_fallthru
      _
    // Predicated region
    $region62: #{tpu_custom_call.1} parent=1 // pred_check
      _
    $region63: #{tpu_custom_call.1} parent=1 // pred_check_branch
      %58 = sbr.rel (0) target = $region65
    $region64: #{tpu_custom_call.1} parent=1 // pred_region
      _
    $region65: #{tpu_custom_call.1} parent=1 // pred_fallthru
      _
    // Predicated region
    $region66: #{tpu_custom_call.1} parent=1 // pred_check
      _
    $region67: #{tpu_custom_call.1} parent=1 // pred_check_branch
      %60 = sbr.rel (0) target = $region69
    $region68: #{tpu_custom_call.1} parent=1 // pred_region
      _
    $region69: #{tpu_custom_call.1} parent=1 // pred_fallthru
      _
    // Predicated region
    $region70: #{tpu_custom_call.1} parent=1 // pred_check
      _
    $region71: #{tpu_custom_call.1} parent=1 // pred_check_branch
      %62 = sbr.rel (0) target = $region73
    $region72: #{tpu_custom_call.1} parent=1 // pred_region
      _
    $region73: #{tpu_custom_call.1} parent=1 // pred_fallthru
      _
    // Predicated region
    $region74: #{tpu_custom_call.1} parent=1 // pred_check
      _
    $region75: #{tpu_custom_call.1} parent=1 // pred_check_branch
      %64 = sbr.rel (0) target = $region77
    $region76: #{tpu_custom_call.1} parent=1 // pred_region
      _
    $region77: #{tpu_custom_call.1} parent=1 // pred_fallthru
      _
    // Predicated region
    $region78: #{tpu_custom_call.1} parent=1 // pred_check
      _
    $region79: #{tpu_custom_call.1} parent=1 // pred_check_branch
      %66 = sbr.rel (0) target = $region81
    $region80: #{tpu_custom_call.1} parent=1 // pred_region
      _
    $region81: #{tpu_custom_call.1} parent=1 // pred_fallthru
      _
    // Predicated region
    $region82: #{tpu_custom_call.1} parent=1 // pred_check
      _
    $region83: #{tpu_custom_call.1} parent=1 // pred_check_branch
      %68 = sbr.rel (0) target = $region85
    $region84: #{tpu_custom_call.1} parent=1 // pred_region
      _
    $region85: #{tpu_custom_call.1} parent=1 // pred_fallthru
      _
    %v70 = vld [vmem:[%s0] sm:$0xff]
    %v71 = vld [vmem:[%s0 + $0x8] sm:$0xff]
    %v72 = vld [vmem:[%s1] sm:$0xf]
    %v73 = vld [vmem:[%s1 + $0x4] sm:$0xf]
    %v74 = vld [vmem:[%s1 + $0x8] sm:$0xf]
    %v75 = vld [vmem:[%s1 + $0xc] sm:$0xf]
    %v76 = vld [vmem:[%s1 + $0x10] sm:$0xf]
    %v77 = vld [vmem:[%s1 + $0x14] sm:$0xf]
    %v78 = vld [vmem:[%s1 + $0x18] sm:$0xf]
    %v79 = vld [vmem:[%s1 + $0x1c] sm:$0xf]
    %v80 = vld [vmem:[%s1 + $0x20] sm:$0xf]
    %v81 = vld [vmem:[%s1 + $0x24] sm:$0xf]
    %v82 = vld [vmem:[%s1 + $0x28] sm:$0xf]
    %v83 = vld [vmem:[%s1 + $0x2c] sm:$0xf]
    %v84 = vld [vmem:[%s1 + $0x30] sm:$0xf]
    %v85 = vld [vmem:[%s1 + $0x34] sm:$0xf]
    %v86 = vld [vmem:[%s1 + $0x38] sm:$0xf]
    %v87 = vld [vmem:[%s1 + $0x3c] sm:$0xf]
    %v88 = vld [vmem:[%s1 + $0x40] sm:$0xf]
    %v89 = vld [vmem:[%s1 + $0x44] sm:$0xf]
    %v90 = vld [vmem:[%s1 + $0x48] sm:$0xf]
    %v91 = vld [vmem:[%s1 + $0x4c] sm:$0xf]
    %v92 = vld [vmem:[%s1 + $0x50] sm:$0xf]
    %v93 = vld [vmem:[%s1 + $0x54] sm:$0xf]
    %v94 = vld [vmem:[%s1 + $0x58] sm:$0xf]
    %v95 = vld [vmem:[%s1 + $0x5c] sm:$0xf]
    %v96 = vld [vmem:[%s1 + $0x60] sm:$0xf]
    %v97 = vld [vmem:[%s1 + $0x64] sm:$0xf]
    %v98 = vld [vmem:[%s1 + $0x68] sm:$0xf]
    %v99 = vld [vmem:[%s1 + $0x6c] sm:$0xf]
    %v100 = vld [vmem:[%s1 + $0x70] sm:$0xf]
    %v101 = vld [vmem:[%s1 + $0x74] sm:$0xf]
    %v102 = vld [vmem:[%s1 + $0x78] sm:$0xf]
    %v103 = vld [vmem:[%s1 + $0x7c] sm:$0xf]
    %v106 = vunpack.c.l.b16 %v70
    %v107 = vunpack.c.h.b16 %v70
    %v108 = vunpack.c.l.b16 %v71
    %v109 = vunpack.c.h.b16 %v71
    %v110 = vpack.c.b16 %v108, %v106
    %v111 = vpack.c.b16 %v109, %v107
    %v146 = vunpack.c.l.b16 %v72
    %v147 = vunpack.c.l.b16 %v73
    %v148 = vunpack.c.l.b16 %v74
    %v149 = vunpack.c.l.b16 %v75
    %v150 = vunpack.c.l.b16 %v76
    %v151 = vunpack.c.l.b16 %v77
    %v152 = vunpack.c.l.b16 %v78
    %v153 = vunpack.c.l.b16 %v79
    %v154 = vunpack.c.l.b16 %v80
    %v155 = vunpack.c.l.b16 %v81
    %v156 = vunpack.c.l.b16 %v82
    %v157 = vunpack.c.l.b16 %v83
    %v158 = vunpack.c.l.b16 %v84
    %v159 = vunpack.c.l.b16 %v85
    %v160 = vunpack.c.l.b16 %v86
    %v161 = vunpack.c.l.b16 %v87
    %v162 = vunpack.c.l.b16 %v88
    %v163 = vunpack.c.l.b16 %v89
    %v164 = vunpack.c.l.b16 %v90
    %v165 = vunpack.c.l.b16 %v91
    %v166 = vunpack.c.l.b16 %v92
    %v167 = vunpack.c.l.b16 %v93
    %v168 = vunpack.c.l.b16 %v94
    %v169 = vunpack.c.l.b16 %v95
    %v170 = vunpack.c.l.b16 %v96
    %v171 = vunpack.c.l.b16 %v97
    %v172 = vunpack.c.l.b16 %v98
    %v173 = vunpack.c.l.b16 %v99
    %v174 = vunpack.c.l.b16 %v100
    %v175 = vunpack.c.l.b16 %v101
    %v176 = vunpack.c.l.b16 %v102
    %v177 = vunpack.c.l.b16 %v103
    %v178 = vpack.c.b16 %v147, %v146
    %v179 = vpack.c.b16 %v149, %v148
    %v180 = vpack.c.b16 %v151, %v150
    %v181 = vpack.c.b16 %v153, %v152
    %v182 = vpack.c.b16 %v155, %v154
    %v183 = vpack.c.b16 %v157, %v156
    %v184 = vpack.c.b16 %v159, %v158
    %v185 = vpack.c.b16 %v161, %v160
    %v186 = vpack.c.b16 %v163, %v162
    %v187 = vpack.c.b16 %v165, %v164
    %v188 = vpack.c.b16 %v167, %v166
    %v189 = vpack.c.b16 %v169, %v168
    %v190 = vpack.c.b16 %v171, %v170
    %v191 = vpack.c.b16 %v173, %v172
    %v192 = vpack.c.b16 %v175, %v174
    %v193 = vpack.c.b16 %v177, %v176
    %210 = vmatprep.subr.bf16.mxu0 0
    %211 = vmatpush1.bf16.msra.mxu0 %v178
    %212 = vmatprep.subr.bf16.mxu0 0
    %213 = vmatpush1.bf16.msra.mxu0 %v179
    %214 = vmatprep.subr.bf16.mxu0 0
    %215 = vmatpush1.bf16.msra.mxu0 %v180
    %216 = vmatprep.subr.bf16.mxu0 0
    %217 = vmatpush1.bf16.msra.mxu0 %v181
    %218 = vmatprep.subr.bf16.mxu0 0
    %219 = vmatpush1.bf16.msra.mxu0 %v182
    %220 = vmatprep.subr.bf16.mxu0 0
    %221 = vmatpush1.bf16.msra.mxu0 %v183
    %222 = vmatprep.subr.bf16.mxu0 0
    %223 = vmatpush1.bf16.msra.mxu0 %v184
    %224 = vmatprep.subr.bf16.mxu0 0
    %225 = vmatpush1.bf16.msra.mxu0 %v185
    %226 = vmatprep.subr.bf16.mxu0 0
    %227 = vmatpush1.bf16.msra.mxu0 %v186
    %228 = vmatprep.subr.bf16.mxu0 0
    %229 = vmatpush1.bf16.msra.mxu0 %v187
    %230 = vmatprep.subr.bf16.mxu0 0
    %231 = vmatpush1.bf16.msra.mxu0 %v188
    %232 = vmatprep.subr.bf16.mxu0 0
    %233 = vmatpush1.bf16.msra.mxu0 %v189
    %234 = vmatprep.subr.bf16.mxu0 0
    %235 = vmatpush1.bf16.msra.mxu0 %v190
    %236 = vmatprep.subr.bf16.mxu0 0
    %237 = vmatpush1.bf16.msra.mxu0 %v191
    %238 = vmatprep.subr.bf16.mxu0 0
    %239 = vmatpush1.bf16.msra.mxu0 %v192
    %240 = vmatprep.subr.bf16.mxu0 0
    %241 = vmatpush1.bf16.msra.mxu0 %v193
    %242 = vmatprep.mubr.bf16.mxu0 %v111
    %243 = vmatmul.mubr.bf16.gmra.mrb[0].mxu0 %v110
    %v244 = vpop.f32.mrb[0].mxu0
    %v245 = vadd.f32 0.0, %v244
    %v246 = vpop.f32.mrb[0].mxu0
    %v247 = vpop.f32.mrb[0].mxu0
    %v248 = vadd.f32 0.0, %v247
    %v249 = vpop.f32.mrb[0].mxu0
    %250 = vdwg.mxu0
    %v251 = vld [vmem:[%s2] sm:$0xff]
    %v252 = vadd.f32 %v245, %v251
    %v253 = vadd.f32 %v248, %v251
    %v254 = vld [vmem:[%s4] sm:$0x1]
    %v255 = vld [vmem:[%s5] sm:$0x1]
    %vm256 = vcmask 261120
    %v257 = vsel %vm256, %v252, 0.0
    %258 = vadd.xlane.f32.xlu0 %v257
    %v259 = vpop.xlane.xlu0 %258
    %v260 = vsel %vm256, %v253, 0.0
    %261 = vadd.xlane.f32.xlu0 %v260
    %v262 = vpop.xlane.xlu0 %261
    %v263 = vrcp.pop 32.0
    %v264 = vmul.f32 %v259, %v263
    %v265 = vmul.f32 %v262, %v263
    %v266 = vsub.f32 %v252, %v264
    %v267 = vsub.f32 %v253, %v265
    %v268 = vmul.f32 %v266, %v266
    %v269 = vmul.f32 %v267, %v267
    %v270 = vsel %vm256, %v268, 0.0
    %271 = vadd.xlane.f32.xlu0 %v270
    %v272 = vpop.xlane.xlu0 %271
    %v273 = vsel %vm256, %v269, 0.0
    %274 = vadd.xlane.f32.xlu0 %v273
    %v275 = vpop.xlane.xlu0 %274
    %v276 = vmul.f32 %v272, %v263
    %v277 = vmul.f32 %v275, %v263
    %v278 = vadd.f32 %v276, 1e-05
    %v279 = vadd.f32 %v277, 1e-05
    %v280 = vrsqrt.pop %v278
    %v281 = vrsqrt.pop %v279
    %v282 = vmul.f32 %v266, %v280
    %v283 = vmul.f32 %v267, %v281
    %v285 = vlaneseq
    %v286 = vshrl.u32 %v285, 7
    %v287 = vsub.s32 0, %v286
    %v288 = vrot.slane %v254, %v287
    %v290 = vmul.f32 %v282, %v288
    %v291 = vmul.f32 %v283, %v288
    %v293 = vlaneseq
    %v294 = vshrl.u32 %v293, 7
    %v295 = vsub.s32 0, %v294
    %v296 = vrot.slane %v255, %v295
    %v298 = vadd.f32 %v290, %v296
    %v299 = vadd.f32 %v291, %v296
    %v300 = vld [vmem:[%s3] sm:$0xff]
    %v301 = vld [vmem:[%s3 + $0x8] sm:$0xff]
    %v302 = vld [vmem:[%s3 + $0x10] sm:$0xff]
    %v303 = vld [vmem:[%s3 + $0x18] sm:$0xff]
    %v304 = vld [vmem:[%s3 + $0x20] sm:$0xff]
    %v305 = vld [vmem:[%s3 + $0x28] sm:$0xff]
    %v306 = vld [vmem:[%s3 + $0x30] sm:$0xff]
    %v307 = vld [vmem:[%s3 + $0x38] sm:$0xff]
    %v308 = vld [vmem:[%s6] sm:$0x1]
    %v309 = vld [vmem:[%s7] sm:$0x1]
    %v310 = vsel %vm256, %v298, 0.0
    %311 = vadd.xlane.f32.xlu0 %v310
    %v312 = vpop.xlane.xlu0 %311
    %v313 = vsel %vm256, %v299, 0.0
    %314 = vadd.xlane.f32.xlu0 %v313
    %v315 = vpop.xlane.xlu0 %314
    %v316 = vmul.f32 %v312, %v263
    %v317 = vmul.f32 %v315, %v263
    %v318 = vsub.f32 %v298, %v316
    %v319 = vsub.f32 %v299, %v317
    %v320 = vmul.f32 %v318, %v318
    %v321 = vmul.f32 %v319, %v319
    %v322 = vsel %vm256, %v320, 0.0
    %323 = vadd.xlane.f32.xlu0 %v322
    %v324 = vpop.xlane.xlu0 %323
    %v325 = vsel %vm256, %v321, 0.0
    %326 = vadd.xlane.f32.xlu0 %v325
    %v327 = vpop.xlane.xlu0 %326
    %v328 = vmul.f32 %v324, %v263
    %v329 = vmul.f32 %v327, %v263
    %v330 = vadd.f32 %v328, 1e-05
    %v331 = vadd.f32 %v329, 1e-05
    %v332 = vrsqrt.pop %v330
    %v333 = vrsqrt.pop %v331
    %v334 = vmul.f32 %v318, %v332
    %v335 = vmul.f32 %v319, %v333
    %v336 = vlaneseq
    %v337 = vshrl.u32 %v336, 7
    %v338 = vsub.s32 0, %v337
    %v339 = vrot.slane %v308, %v338
    %v340 = vmul.f32 %v334, %v339
    %v341 = vmul.f32 %v335, %v339
    %v342 = vlaneseq
    %v343 = vshrl.u32 %v342, 7
    %v344 = vsub.s32 0, %v343
    %v345 = vrot.slane %v309, %v344
    %v346 = vadd.f32 %v340, %v345
    %v347 = vadd.f32 %v341, %v345
    %v348 = vpack.c.bf16 %v347, %v346
    %v349 = vld [vmem:[%s8] sm:$0xf]
    %v350 = vld [vmem:[%s8 + $0x4] sm:$0xf]
    %v351 = vld [vmem:[%s8 + $0x8] sm:$0xf]
    %v352 = vld [vmem:[%s8 + $0xc] sm:$0xf]
    %v353 = vld [vmem:[%s9] sm:$0x1]
    %v354 = vlaneseq
    %v355 = vshrl.u32 %v354, 7
    %v356 = vsub.s32 0, %v355
    %v357 = vrot.slane %v353, %v356
    %v362 = vunpack.c.l.b16 %v349
    %v363 = vunpack.c.l.b16 %v350
    %v364 = vunpack.c.l.b16 %v351
    %v365 = vunpack.c.l.b16 %v352
    %v366 = vpack.c.b16 %v363, %v362
    %v367 = vpack.c.b16 %v365, %v364
    %v371 = vsel %vm256, %v348, 0
    %373 = vmatprep.subr.bf16.mxu0 0
    %374 = vmatpush1.bf16.msra.mxu0 %v366
    %375 = vmatprep.subr.bf16.mxu0 0
    %376 = vmatpush1.bf16.msra.mxu0 %v367
    %377 = vmatprep.subr.bf16.mxu0 0
    %378 = vmatpush1.bf16.msra.mxu0 0
    %379 = vmatprep.subr.bf16.mxu0 0
    %380 = vmatpush1.bf16.msra.mxu0 0
    %381 = vmatprep.subr.bf16.mxu0 0
    %382 = vmatpush1.bf16.msra.mxu0 0
    %383 = vmatprep.subr.bf16.mxu0 0
    %384 = vmatpush1.bf16.msra.mxu0 0
    %385 = vmatprep.subr.bf16.mxu0 0
    %386 = vmatpush1.bf16.msra.mxu0 0
    %387 = vmatprep.subr.bf16.mxu0 0
    %388 = vmatpush1.bf16.msra.mxu0 0
    %389 = vmatprep.subr.bf16.mxu0 0
    %390 = vmatpush1.bf16.msra.mxu0 0
    %391 = vmatprep.subr.bf16.mxu0 0
    %392 = vmatpush1.bf16.msra.mxu0 0
    %393 = vmatprep.subr.bf16.mxu0 0
    %394 = vmatpush1.bf16.msra.mxu0 0
    %395 = vmatprep.subr.bf16.mxu0 0
    %396 = vmatpush1.bf16.msra.mxu0 0
    %397 = vmatprep.subr.bf16.mxu0 0
    %398 = vmatpush1.bf16.msra.mxu0 0
    %399 = vmatprep.subr.bf16.mxu0 0
    %400 = vmatpush1.bf16.msra.mxu0 0
    %401 = vmatprep.subr.bf16.mxu0 0
    %402 = vmatpush1.bf16.msra.mxu0 0
    %403 = vmatprep.subr.bf16.mxu0 0
    %404 = vmatpush1.bf16.msra.mxu0 0
    %405 = vmatprep.mubr.bf16.mxu0 0
    %406 = vmatmul.mubr.bf16.gmra.mrb[0].mxu0 %v371
    %v407 = vpop.f32.mrb[0].mxu0
    %v408 = vadd.f32 %v357, %v407
    %v409 = vpop.f32.mrb[0].mxu0
    %v410 = vpop.f32.mrb[0].mxu0
    %v411 = vadd.f32 %v357, %v410
    %v412 = vpop.f32.mrb[0].mxu0
    %413 = vdwg.mxu0
    %416 = vrot.lane.b32.xlu0 %v408, 120
    %v417 = vpop.permute.xlu0 %416
    %418 = vrot.lane.b32.xlu0 %v411, 120
    %v419 = vpop.permute.xlu0 %418
    %422 = vrot.lane.b32.xlu0 %v408, 112
    %v423 = vpop.permute.xlu0 %422
    %424 = vrot.lane.b32.xlu0 %v411, 112
    %v425 = vpop.permute.xlu0 %424
    %428 = vrot.lane.b32.xlu0 %v408, 104
    %v429 = vpop.permute.xlu0 %428
    %430 = vrot.lane.b32.xlu0 %v411, 104
    %v431 = vpop.permute.xlu0 %430
    %v434 = vpack.c.bf16 %v411, %v408
    %v435 = vpack.c.bf16 %v419, %v417
    %v436 = vpack.c.bf16 %v425, %v423
    %v437 = vpack.c.bf16 %v431, %v429
    %442 = vrot.lane.b32.xlu0 %v434, 96
    %v443 = vpop.permute.xlu0 %442
    %444 = vrot.lane.b32.xlu0 %v435, 96
    %v445 = vpop.permute.xlu0 %444
    %446 = vrot.lane.b32.xlu0 %v436, 96
    %v447 = vpop.permute.xlu0 %446
    %448 = vrot.lane.b32.xlu0 %v437, 96
    %v449 = vpop.permute.xlu0 %448
    %vm450 = vcmask 64512
    %v452 = vsel %vm450, %v434, 0
    %v455 = vsel %vm450, %v435, 0
    %v458 = vsel %vm450, %v436, 0
    %v461 = vsel %vm450, %v437, 0
    %v464 = vsel %vm450, %v443, 0
    %v467 = vsel %vm450, %v445, 0
    %v470 = vsel %vm450, %v447, 0
    %v473 = vsel %vm450, %v449, 0
    %475 = vmatprep.subr.bf16.mxu0 0
    %476 = vmatpush1.bf16.xpose.msra.mxu0 %v464
    %477 = vmatprep.subr.bf16.mxu0 0
    %478 = vmatpush1.bf16.xpose.msra.mxu0 %v467
    %479 = vmatprep.subr.bf16.mxu0 0
    %480 = vmatpush1.bf16.xpose.msra.mxu0 %v470
    %481 = vmatprep.subr.bf16.mxu0 0
    %482 = vmatpush1.bf16.xpose.msra.mxu0 %v473
    %483 = vmatprep.subr.bf16.mxu0 0
    %484 = vmatpush1.bf16.xpose.msra.mxu0 0
    %485 = vmatprep.subr.bf16.mxu0 0
    %486 = vmatpush1.bf16.xpose.msra.mxu0 0
    %487 = vmatprep.subr.bf16.mxu0 0
    %488 = vmatpush1.bf16.xpose.msra.mxu0 0
    %489 = vmatprep.subr.bf16.mxu0 0
    %490 = vmatpush1.bf16.xpose.msra.mxu0 0
    %491 = vmatprep.subr.bf16.mxu0 0
    %492 = vmatpush1.bf16.xpose.msra.mxu0 0
    %493 = vmatprep.subr.bf16.mxu0 0
    %494 = vmatpush1.bf16.xpose.msra.mxu0 0
    %495 = vmatprep.subr.bf16.mxu0 0
    %496 = vmatpush1.bf16.xpose.msra.mxu0 0
    %497 = vmatprep.subr.bf16.mxu0 0
    %498 = vmatpush1.bf16.xpose.msra.mxu0 0
    %499 = vmatprep.subr.bf16.mxu0 0
    %500 = vmatpush1.bf16.xpose.msra.mxu0 0
    %501 = vmatprep.subr.bf16.mxu0 0
    %502 = vmatpush1.bf16.xpose.msra.mxu0 0
    %503 = vmatprep.subr.bf16.mxu0 0
    %504 = vmatpush1.bf16.xpose.msra.mxu0 0
    %505 = vmatprep.subr.bf16.mxu0 0
    %506 = vmatpush1.bf16.xpose.msra.mxu0 0
    %507 = vmatprep.mubr.bf16.mxu0 0
    %508 = vmatmul.mubr.bf16.gmra.mrb[0].mxu0 %v452
    %v509 = vpop.f32.mrb[0].mxu0
    %v510 = vadd.f32 %v300, %v509
    %v511 = vpop.f32.mrb[0].mxu0
    %v512 = vpop.f32.mrb[0].mxu0
    %v513 = vadd.f32 %v301, %v512
    %v514 = vpop.f32.mrb[0].mxu0
    %515 = vmatprep.mubr.bf16.mxu0 0
    %516 = vmatmul.mubr.bf16.gmra.mrb[0].mxu0 %v455
    %v517 = vpop.f32.mrb[0].mxu0
    %v518 = vadd.f32 %v302, %v517
    %v519 = vpop.f32.mrb[0].mxu0
    %v520 = vpop.f32.mrb[0].mxu0
    %v521 = vadd.f32 %v303, %v520
    %v522 = vpop.f32.mrb[0].mxu0
    %523 = vmatprep.mubr.bf16.mxu0 0
    %524 = vmatmul.mubr.bf16.gmra.mrb[0].mxu0 %v458
    %v525 = vpop.f32.mrb[0].mxu0
    %v526 = vadd.f32 %v304, %v525
    %v527 = vpop.f32.mrb[0].mxu0
    %v528 = vpop.f32.mrb[0].mxu0
    %v529 = vadd.f32 %v305, %v528
    %v530 = vpop.f32.mrb[0].mxu0
    %531 = vmatprep.mubr.bf16.mxu0 0
    %532 = vmatmul.mubr.bf16.gmra.mrb[0].mxu0 %v461
    %v533 = vpop.f32.mrb[0].mxu0
    %v534 = vadd.f32 %v306, %v533
    %v535 = vpop.f32.mrb[0].mxu0
    %v536 = vpop.f32.mrb[0].mxu0
    %v537 = vadd.f32 %v307, %v536
    %v538 = vpop.f32.mrb[0].mxu0
    %539 = vdwg.mxu0
    %vm540 = vcmask 523264
    %v541 = vsel %vm540, %v510, -inf
    %542 = vmax.xlane.f32.xlu0 %v541
    %v543 = vpop.xlane.xlu0 %542
    %v544 = vsel %vm540, %v513, -inf
    %545 = vmax.xlane.f32.xlu0 %v544
    %v546 = vpop.xlane.xlu0 %545
    %v547 = vsel %vm540, %v518, -inf
    %548 = vmax.xlane.f32.xlu0 %v547
    %v549 = vpop.xlane.xlu0 %548
    %v550 = vsel %vm540, %v521, -inf
    %551 = vmax.xlane.f32.xlu0 %v550
    %v552 = vpop.xlane.xlu0 %551
    %v553 = vsel %vm540, %v526, -inf
    %554 = vmax.xlane.f32.xlu0 %v553
    %v555 = vpop.xlane.xlu0 %554
    %v556 = vsel %vm540, %v529, -inf
    %557 = vmax.xlane.f32.xlu0 %v556
    %v558 = vpop.xlane.xlu0 %557
    %v559 = vsel %vm540, %v534, -inf
    %560 = vmax.xlane.f32.xlu0 %v559
    %v561 = vpop.xlane.xlu0 %560
    %v562 = vsel %vm540, %v537, -inf
    %563 = vmax.xlane.f32.xlu0 %v562
    %v564 = vpop.xlane.xlu0 %563
    %v565 = vsub.f32 %v510, %v543
    %v566 = vsub.f32 %v513, %v546
    %v567 = vsub.f32 %v518, %v549
    %v568 = vsub.f32 %v521, %v552
    %v569 = vsub.f32 %v526, %v555
    %v570 = vsub.f32 %v529, %v558
    %v571 = vsub.f32 %v534, %v561
    %v572 = vsub.f32 %v537, %v564
    %v573 = vmul.f32 %v565, 1.442695
    %v574 = vpow.pop %v573
    %v575 = vmul.f32 %v566, 1.442695
    %v576 = vpow.pop %v575
    %v577 = vmul.f32 %v567, 1.442695
    %v578 = vpow.pop %v577
    %v579 = vmul.f32 %v568, 1.442695
    %v580 = vpow.pop %v579
    %v581 = vmul.f32 %v569, 1.442695
    %v582 = vpow.pop %v581
    %v583 = vmul.f32 %v570, 1.442695
    %v584 = vpow.pop %v583
    %v585 = vmul.f32 %v571, 1.442695
    %v586 = vpow.pop %v585
    %v587 = vmul.f32 %v572, 1.442695
    %v588 = vpow.pop %v587
    %v589 = vsel %vm540, %v574, 0.0
    %590 = vadd.xlane.f32.xlu0 %v589
    %v591 = vpop.xlane.xlu0 %590
    %v592 = vsel %vm540, %v576, 0.0
    %593 = vadd.xlane.f32.xlu0 %v592
    %v594 = vpop.xlane.xlu0 %593
    %v595 = vsel %vm540, %v578, 0.0
    %596 = vadd.xlane.f32.xlu0 %v595
    %v597 = vpop.xlane.xlu0 %596
    %v598 = vsel %vm540, %v580, 0.0
    %599 = vadd.xlane.f32.xlu0 %v598
    %v600 = vpop.xlane.xlu0 %599
    %v601 = vsel %vm540, %v582, 0.0
    %602 = vadd.xlane.f32.xlu0 %v601
    %v603 = vpop.xlane.xlu0 %602
    %v604 = vsel %vm540, %v584, 0.0
    %605 = vadd.xlane.f32.xlu0 %v604
    %v606 = vpop.xlane.xlu0 %605
    %v607 = vsel %vm540, %v586, 0.0
    %608 = vadd.xlane.f32.xlu0 %v607
    %v609 = vpop.xlane.xlu0 %608
    %v610 = vsel %vm540, %v588, 0.0
    %611 = vadd.xlane.f32.xlu0 %v610
    %v612 = vpop.xlane.xlu0 %611
    %v613 = vrcp.pop %v591
    %v614 = vrcp.pop %v594
    %v615 = vrcp.pop %v597
    %v616 = vrcp.pop %v600
    %v617 = vrcp.pop %v603
    %v618 = vrcp.pop %v606
    %v619 = vrcp.pop %v609
    %v620 = vrcp.pop %v612
    %v621 = vmul.f32 %v574, %v613
    %v622 = vmul.f32 %v576, %v614
    %v623 = vmul.f32 %v578, %v615
    %v624 = vmul.f32 %v580, %v616
    %v625 = vmul.f32 %v582, %v617
    %v626 = vmul.f32 %v584, %v618
    %v627 = vmul.f32 %v586, %v619
    %v628 = vmul.f32 %v588, %v620
    %v629 = vpack.c.bf16 %v622, %v621
    %v630 = vpack.c.bf16 %v624, %v623
    %v631 = vpack.c.bf16 %v626, %v625
    %v632 = vpack.c.bf16 %v628, %v627
    %633 = vrot.lane.b32.xlu0 %v434, 64
    %v634 = vpop.permute.xlu0 %633
    %635 = vrot.lane.b32.xlu0 %v435, 64
    %v636 = vpop.permute.xlu0 %635
    %637 = vrot.lane.b32.xlu0 %v436, 64
    %v638 = vpop.permute.xlu0 %637
    %639 = vrot.lane.b32.xlu0 %v437, 64
    %v640 = vpop.permute.xlu0 %639
    %v646 = vsel %vm540, %v629, 0
    %v649 = vsel %vm540, %v630, 0
    %v652 = vsel %vm540, %v631, 0
    %v655 = vsel %vm540, %v632, 0
    %657 = vmatprep.subr.bf16.mxu0 0
    %658 = vmatpush1.bf16.msra.mxu0 %v634
    %659 = vmatprep.subr.bf16.mxu0 0
    %660 = vmatpush1.bf16.msra.mxu0 %v636
    %661 = vmatprep.subr.bf16.mxu0 0
    %662 = vmatpush1.bf16.msra.mxu0 %v638
    %663 = vmatprep.subr.bf16.mxu0 0
    %664 = vmatpush1.bf16.msra.mxu0 %v640
    %665 = vmatprep.subr.bf16.mxu0 0
    %666 = vmatpush1.bf16.msra.mxu0 0
    %667 = vmatprep.subr.bf16.mxu0 0
    %668 = vmatpush1.bf16.msra.mxu0 0
    %669 = vmatprep.subr.bf16.mxu0 0
    %670 = vmatpush1.bf16.msra.mxu0 0
    %671 = vmatprep.subr.bf16.mxu0 0
    %672 = vmatpush1.bf16.msra.mxu0 0
    %673 = vmatprep.subr.bf16.mxu0 0
    %674 = vmatpush1.bf16.msra.mxu0 0
    %675 = vmatprep.subr.bf16.mxu0 0
    %676 = vmatpush1.bf16.msra.mxu0 0
    %677 = vmatprep.subr.bf16.mxu0 0
    %678 = vmatpush1.bf16.msra.mxu0 0
    %679 = vmatprep.subr.bf16.mxu0 0
    %680 = vmatpush1.bf16.msra.mxu0 0
    %681 = vmatprep.subr.bf16.mxu0 0
    %682 = vmatpush1.bf16.msra.mxu0 0
    %683 = vmatprep.subr.bf16.mxu0 0
    %684 = vmatpush1.bf16.msra.mxu0 0
    %685 = vmatprep.subr.bf16.mxu0 0
    %686 = vmatpush1.bf16.msra.mxu0 0
    %687 = vmatprep.subr.bf16.mxu0 0
    %688 = vmatpush1.bf16.msra.mxu0 0
    %689 = vmatprep.mubr.bf16.mxu0 0
    %690 = vmatmul.mubr.bf16.gmra.mrb[0].mxu0 %v646
    %v691 = vpop.f32.mrb[0].mxu0
    %v692 = vadd.f32 0.0, %v691
    %v693 = vpop.f32.mrb[0].mxu0
    %v694 = vpop.f32.mrb[0].mxu0
    %v695 = vadd.f32 0.0, %v694
    %v696 = vpop.f32.mrb[0].mxu0
    %697 = vmatprep.mubr.bf16.mxu0 0
    %698 = vmatmul.mubr.bf16.gmra.mrb[0].mxu0 %v649
    %v699 = vpop.f32.mrb[0].mxu0
    %v700 = vadd.f32 0.0, %v699
    %v701 = vpop.f32.mrb[0].mxu0
    %v702 = vpop.f32.mrb[0].mxu0
    %v703 = vadd.f32 0.0, %v702
    %v704 = vpop.f32.mrb[0].mxu0
    %705 = vmatprep.mubr.bf16.mxu0 0
    %706 = vmatmul.mubr.bf16.gmra.mrb[0].mxu0 %v652
    %v707 = vpop.f32.mrb[0].mxu0
    %v708 = vadd.f32 0.0, %v707
    %v709 = vpop.f32.mrb[0].mxu0
    %v710 = vpop.f32.mrb[0].mxu0
    %v711 = vadd.f32 0.0, %v710
    %v712 = vpop.f32.mrb[0].mxu0
    %713 = vmatprep.mubr.bf16.mxu0 0
    %714 = vmatmul.mubr.bf16.gmra.mrb[0].mxu0 %v655
    %v715 = vpop.f32.mrb[0].mxu0
    %v716 = vadd.f32 0.0, %v715
    %v717 = vpop.f32.mrb[0].mxu0
    %v718 = vpop.f32.mrb[0].mxu0
    %v719 = vadd.f32 0.0, %v718
    %v720 = vpop.f32.mrb[0].mxu0
    %721 = vdwg.mxu0
    %724 = vrot.lane.b32.xlu0 %v700, 8
    %v725 = vpop.permute.xlu0 %724
    %726 = vrot.lane.b32.xlu0 %v703, 8
    %v727 = vpop.permute.xlu0 %726
    %732 = vrot.lane.b32.xlu0 %v708, 16
    %v733 = vpop.permute.xlu0 %732
    %734 = vrot.lane.b32.xlu0 %v711, 16
    %v735 = vpop.permute.xlu0 %734
    %740 = vrot.lane.b32.xlu0 %v716, 24
    %v741 = vpop.permute.xlu0 %740
    %742 = vrot.lane.b32.xlu0 %v719, 24
    %v743 = vpop.permute.xlu0 %742
    %v746 = vsel %vm450, %v692, %v725
    %v747 = vsel %vm450, %v695, %v727
    %vm748 = vcmask 130048
    %v749 = vsel %vm748, %v746, %v733
    %v750 = vsel %vm748, %v747, %v735
    %vm751 = vcmask 195584
    %v752 = vsel %vm751, %v749, %v741
    %v753 = vsel %vm751, %v750, %v743
    %v754 = vpack.c.bf16 %v753, %v752
    %v755 = vld [vmem:[%s10] sm:$0xf]
    %v756 = vld [vmem:[%s10 + $0x4] sm:$0xf]
    %v757 = vld [vmem:[%s10 + $0x8] sm:$0xf]
    %v758 = vld [vmem:[%s10 + $0xc] sm:$0xf]
    %v759 = vld [vmem:[%s11] sm:$0x1]
    %v760 = vlaneseq
    %v761 = vshrl.u32 %v760, 7
    %v762 = vsub.s32 0, %v761
    %v763 = vrot.slane %v759, %v762
    %v768 = vunpack.c.l.b16 %v755
    %v769 = vunpack.c.l.b16 %v756
    %v770 = vunpack.c.l.b16 %v757
    %v771 = vunpack.c.l.b16 %v758
    %v772 = vpack.c.b16 %v769, %v768
    %v773 = vpack.c.b16 %v771, %v770
    %v777 = vsel %vm256, %v754, 0
    %779 = vmatprep.subr.bf16.mxu0 0
    %780 = vmatpush1.bf16.msra.mxu0 %v772
    %781 = vmatprep.subr.bf16.mxu0 0
    %782 = vmatpush1.bf16.msra.mxu0 %v773
    %783 = vmatprep.subr.bf16.mxu0 0
    %784 = vmatpush1.bf16.msra.mxu0 0
    %785 = vmatprep.subr.bf16.mxu0 0
    %786 = vmatpush1.bf16.msra.mxu0 0
    %787 = vmatprep.subr.bf16.mxu0 0
    %788 = vmatpush1.bf16.msra.mxu0 0
    %789 = vmatprep.subr.bf16.mxu0 0
    %790 = vmatpush1.bf16.msra.mxu0 0
    %791 = vmatprep.subr.bf16.mxu0 0
    %792 = vmatpush1.bf16.msra.mxu0 0
    %793 = vmatprep.subr.bf16.mxu0 0
    %794 = vmatpush1.bf16.msra.mxu0 0
    %795 = vmatprep.subr.bf16.mxu0 0
    %796 = vmatpush1.bf16.msra.mxu0 0
    %797 = vmatprep.subr.bf16.mxu0 0
    %798 = vmatpush1.bf16.msra.mxu0 0
    %799 = vmatprep.subr.bf16.mxu0 0
    %800 = vmatpush1.bf16.msra.mxu0 0
    %801 = vmatprep.subr.bf16.mxu0 0
    %802 = vmatpush1.bf16.msra.mxu0 0
    %803 = vmatprep.subr.bf16.mxu0 0
    %804 = vmatpush1.bf16.msra.mxu0 0
    %805 = vmatprep.subr.bf16.mxu0 0
    %806 = vmatpush1.bf16.msra.mxu0 0
    %807 = vmatprep.subr.bf16.mxu0 0
    %808 = vmatpush1.bf16.msra.mxu0 0
    %809 = vmatprep.subr.bf16.mxu0 0
    %810 = vmatpush1.bf16.msra.mxu0 0
    %811 = vmatprep.mubr.bf16.mxu0 0
    %812 = vmatmul.mubr.bf16.gmra.mrb[0].mxu0 %v777
    %v813 = vpop.f32.mrb[0].mxu0
    %v814 = vadd.f32 %v763, %v813
    %v815 = vpop.f32.mrb[0].mxu0
    %v816 = vpop.f32.mrb[0].mxu0
    %v817 = vadd.f32 %v763, %v816
    %v818 = vpop.f32.mrb[0].mxu0
    %819 = vdwg.mxu0
    %v820 = vadd.f32 %v298, %v814
    %v821 = vadd.f32 %v299, %v817
    %v822 = vld [vmem:[%s12] sm:$0x1]
    %v823 = vld [vmem:[%s13] sm:$0x1]
    %v824 = vsel %vm256, %v820, 0.0
    %825 = vadd.xlane.f32.xlu0 %v824
    %v826 = vpop.xlane.xlu0 %825
    %v827 = vsel %vm256, %v821, 0.0
    %828 = vadd.xlane.f32.xlu0 %v827
    %v829 = vpop.xlane.xlu0 %828
    %v830 = vmul.f32 %v826, %v263
    %v831 = vmul.f32 %v829, %v263
    %v832 = vsub.f32 %v820, %v830
    %v833 = vsub.f32 %v821, %v831
    %v834 = vmul.f32 %v832, %v832
    %v835 = vmul.f32 %v833, %v833
    %v836 = vsel %vm256, %v834, 0.0
    %837 = vadd.xlane.f32.xlu0 %v836
    %v838 = vpop.xlane.xlu0 %837
    %v839 = vsel %vm256, %v835, 0.0
    %840 = vadd.xlane.f32.xlu0 %v839
    %v841 = vpop.xlane.xlu0 %840
    %v842 = vmul.f32 %v838, %v263
    %v843 = vmul.f32 %v841, %v263
    %v844 = vadd.f32 %v842, 1e-05
    %v845 = vadd.f32 %v843, 1e-05
    %v846 = vrsqrt.pop %v844
    %v847 = vrsqrt.pop %v845
    %v848 = vmul.f32 %v832, %v846
    %v849 = vmul.f32 %v833, %v847
    %v850 = vlaneseq
    %v851 = vshrl.u32 %v850, 7
    %v852 = vsub.s32 0, %v851
    %v853 = vrot.slane %v822, %v852
    %v854 = vmul.f32 %v848, %v853
    %v855 = vmul.f32 %v849, %v853
    %v856 = vlaneseq
    %v857 = vshrl.u32 %v856, 7
    %v858 = vsub.s32 0, %v857
    %v859 = vrot.slane %v823, %v858
    %v860 = vadd.f32 %v854, %v859
    %v861 = vadd.f32 %v855, %v859
    %v862 = vpack.c.bf16 %v861, %v860
    %v863 = vld [vmem:[%s14] sm:$0xf]
    %v864 = vld [vmem:[%s14 + $0x4] sm:$0xf]
    %v865 = vld [vmem:[%s14 + $0x8] sm:$0xf]
    %v866 = vld [vmem:[%s14 + $0xc] sm:$0xf]
    %v867 = vld [vmem:[%s15] sm:$0x1]
    %v868 = vlaneseq
    %v869 = vshrl.u32 %v868, 7
    %v870 = vsub.s32 0, %v869
    %v871 = vrot.slane %v867, %v870
    %v876 = vunpack.c.l.b16 %v863
    %v877 = vunpack.c.l.b16 %v864
    %v878 = vunpack.c.l.b16 %v865
    %v879 = vunpack.c.l.b16 %v866
    %v880 = vpack.c.b16 %v877, %v876
    %v881 = vpack.c.b16 %v879, %v878
    %v885 = vsel %vm256, %v862, 0
    %887 = vmatprep.subr.bf16.mxu0 0
    %888 = vmatpush1.bf16.msra.mxu0 %v880
    %889 = vmatprep.subr.bf16.mxu0 0
    %890 = vmatpush1.bf16.msra.mxu0 %v881
    %891 = vmatprep.subr.bf16.mxu0 0
    %892 = vmatpush1.bf16.msra.mxu0 0
    %893 = vmatprep.subr.bf16.mxu0 0
    %894 = vmatpush1.bf16.msra.mxu0 0
    %895 = vmatprep.subr.bf16.mxu0 0
    %896 = vmatpush1.bf16.msra.mxu0 0
    %897 = vmatprep.subr.bf16.mxu0 0
    %898 = vmatpush1.bf16.msra.mxu0 0
    %899 = vmatprep.subr.bf16.mxu0 0
    %900 = vmatpush1.bf16.msra.mxu0 0
    %901 = vmatprep.subr.bf16.mxu0 0
    %902 = vmatpush1.bf16.msra.mxu0 0
    %903 = vmatprep.subr.bf16.mxu0 0
    %904 = vmatpush1.bf16.msra.mxu0 0
    %905 = vmatprep.subr.bf16.mxu0 0
    %906 = vmatpush1.bf16.msra.mxu0 0
    %907 = vmatprep.subr.bf16.mxu0 0
    %908 = vmatpush1.bf16.msra.mxu0 0
    %909 = vmatprep.subr.bf16.mxu0 0
    %910 = vmatpush1.bf16.msra.mxu0 0
    %911 = vmatprep.subr.bf16.mxu0 0
    %912 = vmatpush1.bf16.msra.mxu0 0
    %913 = vmatprep.subr.bf16.mxu0 0
    %914 = vmatpush1.bf16.msra.mxu0 0
    %915 = vmatprep.subr.bf16.mxu0 0
    %916 = vmatpush1.bf16.msra.mxu0 0
    %917 = vmatprep.subr.bf16.mxu0 0
    %918 = vmatpush1.bf16.msra.mxu0 0
    %919 = vmatprep.mubr.bf16.mxu0 0
    %920 = vmatmul.mubr.bf16.gmra.mrb[0].mxu0 %v885
    %v921 = vpop.f32.mrb[0].mxu0
    %v922 = vadd.f32 %v871, %v921
    %v923 = vpop.f32.mrb[0].mxu0
    %v924 = vpop.f32.mrb[0].mxu0
    %v925 = vadd.f32 %v871, %v924
    %v926 = vpop.f32.mrb[0].mxu0
    %927 = vdwg.mxu0
    %v928 = vmul.f32 %v922, 1.702
    %v929 = vmul.f32 %v925, 1.702
    %v930 = vxor.u32 %v928, 2147483648
    %v931 = vxor.u32 %v929, 2147483648
    %v932 = vmul.f32 %v930, 1.442695
    %v933 = vpow.pop %v932
    %v934 = vmul.f32 %v931, 1.442695
    %v935 = vpow.pop %v934
    %v936 = vadd.f32 %v933, 1.0
    %v937 = vadd.f32 %v935, 1.0
    %v938 = vrcp.pop %v936
    %v939 = vmul.f32 1.0, %v938
    %v940 = vrcp.pop %v937
    %v941 = vmul.f32 1.0, %v940
    %v942 = vmul.f32 %v922, %v939
    %v943 = vmul.f32 %v925, %v941
    %v944 = vpack.c.bf16 %v943, %v942
    %v945 = vld [vmem:[%s16] sm:$0xf]
    %v946 = vld [vmem:[%s16 + $0x4] sm:$0xf]
    %v947 = vld [vmem:[%s16 + $0x8] sm:$0xf]
    %v948 = vld [vmem:[%s16 + $0xc] sm:$0xf]
    %v949 = vld [vmem:[%s16 + $0x10] sm:$0xf]
    %v950 = vld [vmem:[%s16 + $0x14] sm:$0xf]
    %v951 = vld [vmem:[%s16 + $0x18] sm:$0xf]
    %v952 = vld [vmem:[%s16 + $0x1c] sm:$0xf]
    %v953 = vld [vmem:[%s16 + $0x20] sm:$0xf]
    %v954 = vld [vmem:[%s16 + $0x24] sm:$0xf]
    %v955 = vld [vmem:[%s16 + $0x28] sm:$0xf]
    %v956 = vld [vmem:[%s16 + $0x2c] sm:$0xf]
    %v957 = vld [vmem:[%s16 + $0x30] sm:$0xf]
    %v958 = vld [vmem:[%s16 + $0x34] sm:$0xf]
    %v959 = vld [vmem:[%s16 + $0x38] sm:$0xf]
    %v960 = vld [vmem:[%s16 + $0x3c] sm:$0xf]
    %v961 = vld [vmem:[%s17] sm:$0x1]
    %v962 = vlaneseq
    %v963 = vshrl.u32 %v962, 7
    %v964 = vsub.s32 0, %v963
    %v965 = vrot.slane %v961, %v964
    %v982 = vunpack.c.l.b16 %v945
    %v983 = vunpack.c.l.b16 %v946
    %v984 = vunpack.c.l.b16 %v947
    %v985 = vunpack.c.l.b16 %v948
    %v986 = vunpack.c.l.b16 %v949
    %v987 = vunpack.c.l.b16 %v950
    %v988 = vunpack.c.l.b16 %v951
    %v989 = vunpack.c.l.b16 %v952
    %v990 = vunpack.c.l.b16 %v953
    %v991 = vunpack.c.l.b16 %v954
    %v992 = vunpack.c.l.b16 %v955
    %v993 = vunpack.c.l.b16 %v956
    %v994 = vunpack.c.l.b16 %v957
    %v995 = vunpack.c.l.b16 %v958
    %v996 = vunpack.c.l.b16 %v959
    %v997 = vunpack.c.l.b16 %v960
    %v998 = vpack.c.b16 %v983, %v982
    %v999 = vpack.c.b16 %v985, %v984
    %v1000 = vpack.c.b16 %v987, %v986
    %v1001 = vpack.c.b16 %v989, %v988
    %v1002 = vpack.c.b16 %v991, %v990
    %v1003 = vpack.c.b16 %v993, %v992
    %v1004 = vpack.c.b16 %v995, %v994
    %v1005 = vpack.c.b16 %v997, %v996
    %1014 = vmatprep.subr.bf16.mxu0 0
    %1015 = vmatpush1.bf16.msra.mxu0 %v998
    %1016 = vmatprep.subr.bf16.mxu0 0
    %1017 = vmatpush1.bf16.msra.mxu0 %v999
    %1018 = vmatprep.subr.bf16.mxu0 0
    %1019 = vmatpush1.bf16.msra.mxu0 %v1000
    %1020 = vmatprep.subr.bf16.mxu0 0
    %1021 = vmatpush1.bf16.msra.mxu0 %v1001
    %1022 = vmatprep.subr.bf16.mxu0 0
    %1023 = vmatpush1.bf16.msra.mxu0 %v1002
    %1024 = vmatprep.subr.bf16.mxu0 0
    %1025 = vmatpush1.bf16.msra.mxu0 %v1003
    %1026 = vmatprep.subr.bf16.mxu0 0
    %1027 = vmatpush1.bf16.msra.mxu0 %v1004
    %1028 = vmatprep.subr.bf16.mxu0 0
    %1029 = vmatpush1.bf16.msra.mxu0 %v1005
    %1030 = vmatprep.subr.bf16.mxu0 0
    %1031 = vmatpush1.bf16.msra.mxu0 0
    %1032 = vmatprep.subr.bf16.mxu0 0
    %1033 = vmatpush1.bf16.msra.mxu0 0
    %1034 = vmatprep.subr.bf16.mxu0 0
    %1035 = vmatpush1.bf16.msra.mxu0 0
    %1036 = vmatprep.subr.bf16.mxu0 0
    %1037 = vmatpush1.bf16.msra.mxu0 0
    %1038 = vmatprep.subr.bf16.mxu0 0
    %1039 = vmatpush1.bf16.msra.mxu0 0
    %1040 = vmatprep.subr.bf16.mxu0 0
    %1041 = vmatpush1.bf16.msra.mxu0 0
    %1042 = vmatprep.subr.bf16.mxu0 0
    %1043 = vmatpush1.bf16.msra.mxu0 0
    %1044 = vmatprep.subr.bf16.mxu0 0
    %1045 = vmatpush1.bf16.msra.mxu0 0
    %1046 = vmatprep.mubr.bf16.mxu0 0
    %1047 = vmatmul.mubr.bf16.gmra.mrb[0].mxu0 %v944
    %v1048 = vpop.f32.mrb[0].mxu0
    %v1049 = vadd.f32 %v965, %v1048
    %v1050 = vpop.f32.mrb[0].mxu0
    %v1051 = vpop.f32.mrb[0].mxu0
    %v1052 = vadd.f32 %v965, %v1051
    %v1053 = vpop.f32.mrb[0].mxu0
    %1054 = vdwg.mxu0
    %v1055 = vadd.f32 %v820, %v1049
    %v1056 = vadd.f32 %v821, %v1052
    %v1057 = vld [vmem:[%s6 + $0x1] sm:$0x1]
    %v1058 = vld [vmem:[%s7 + $0x1] sm:$0x1]
    %v1059 = vsel %vm256, %v1055, 0.0
    %1060 = vadd.xlane.f32.xlu0 %v1059
    %v1061 = vpop.xlane.xlu0 %1060
    %v1062 = vsel %vm256, %v1056, 0.0
    %1063 = vadd.xlane.f32.xlu0 %v1062
    %v1064 = vpop.xlane.xlu0 %1063
    %v1065 = vmul.f32 %v1061, %v263
    %v1066 = vmul.f32 %v1064, %v263
    %v1067 = vsub.f32 %v1055, %v1065
    %v1068 = vsub.f32 %v1056, %v1066
    %v1069 = vmul.f32 %v1067, %v1067
    %v1070 = vmul.f32 %v1068, %v1068
    %v1071 = vsel %vm256, %v1069, 0.0
    %1072 = vadd.xlane.f32.xlu0 %v1071
    %v1073 = vpop.xlane.xlu0 %1072
    %v1074 = vsel %vm256, %v1070, 0.0
    %1075 = vadd.xlane.f32.xlu0 %v1074
    %v1076 = vpop.xlane.xlu0 %1075
    %v1077 = vmul.f32 %v1073, %v263
    %v1078 = vmul.f32 %v1076, %v263
    %v1079 = vadd.f32 %v1077, 1e-05
    %v1080 = vadd.f32 %v1078, 1e-05
    %v1081 = vrsqrt.pop %v1079
    %v1082 = vrsqrt.pop %v1080
    %v1083 = vmul.f32 %v1067, %v1081
    %v1084 = vmul.f32 %v1068, %v1082
    %v1085 = vlaneseq
    %v1086 = vshrl.u32 %v1085, 7
    %v1087 = vsub.s32 0, %v1086
    %v1088 = vrot.slane %v1057, %v1087
    %v1089 = vmul.f32 %v1083, %v1088
    %v1090 = vmul.f32 %v1084, %v1088
    %v1091 = vlaneseq
    %v1092 = vshrl.u32 %v1091, 7
    %v1093 = vsub.s32 0, %v1092
    %v1094 = vrot.slane %v1058, %v1093
    %v1095 = vadd.f32 %v1089, %v1094
    %v1096 = vadd.f32 %v1090, %v1094
    %v1097 = vpack.c.bf16 %v1096, %v1095
    %s1098 = scalar_lea.vmem %s8, 16
    %v1099 = vld [vmem:[%s1098] sm:$0xf]
    %v1100 = vld [vmem:[%s1098 + $0x4] sm:$0xf]
    %v1101 = vld [vmem:[%s1098 + $0x8] sm:$0xf]
    %v1102 = vld [vmem:[%s1098 + $0xc] sm:$0xf]
    %v1103 = vld [vmem:[%s9 + $0x1] sm:$0x1]
    %v1104 = vlaneseq
    %v1105 = vshrl.u32 %v1104, 7
    %v1106 = vsub.s32 0, %v1105
    %v1107 = vrot.slane %v1103, %v1106
    %v1112 = vunpack.c.l.b16 %v1099
    %v1113 = vunpack.c.l.b16 %v1100
    %v1114 = vunpack.c.l.b16 %v1101
    %v1115 = vunpack.c.l.b16 %v1102
    %v1116 = vpack.c.b16 %v1113, %v1112
    %v1117 = vpack.c.b16 %v1115, %v1114
    %v1121 = vsel %vm256, %v1097, 0
    %1123 = vmatprep.subr.bf16.mxu0 0
    %1124 = vmatpush1.bf16.msra.mxu0 %v1116
    %1125 = vmatprep.subr.bf16.mxu0 0
    %1126 = vmatpush1.bf16.msra.mxu0 %v1117
    %1127 = vmatprep.subr.bf16.mxu0 0
    %1128 = vmatpush1.bf16.msra.mxu0 0
    %1129 = vmatprep.subr.bf16.mxu0 0
    %1130 = vmatpush1.bf16.msra.mxu0 0
    %1131 = vmatprep.subr.bf16.mxu0 0
    %1132 = vmatpush1.bf16.msra.mxu0 0
    %1133 = vmatprep.subr.bf16.mxu0 0
    %1134 = vmatpush1.bf16.msra.mxu0 0
    %1135 = vmatprep.subr.bf16.mxu0 0
    %1136 = vmatpush1.bf16.msra.mxu0 0
    %1137 = vmatprep.subr.bf16.mxu0 0
    %1138 = vmatpush1.bf16.msra.mxu0 0
    %1139 = vmatprep.subr.bf16.mxu0 0
    %1140 = vmatpush1.bf16.msra.mxu0 0
    %1141 = vmatprep.subr.bf16.mxu0 0
    %1142 = vmatpush1.bf16.msra.mxu0 0
    %1143 = vmatprep.subr.bf16.mxu0 0
    %1144 = vmatpush1.bf16.msra.mxu0 0
    %1145 = vmatprep.subr.bf16.mxu0 0
    %1146 = vmatpush1.bf16.msra.mxu0 0
    %1147 = vmatprep.subr.bf16.mxu0 0
    %1148 = vmatpush1.bf16.msra.mxu0 0
    %1149 = vmatprep.subr.bf16.mxu0 0
    %1150 = vmatpush1.bf16.msra.mxu0 0
    %1151 = vmatprep.subr.bf16.mxu0 0
    %1152 = vmatpush1.bf16.msra.mxu0 0
    %1153 = vmatprep.subr.bf16.mxu0 0
    %1154 = vmatpush1.bf16.msra.mxu0 0
    %1155 = vmatprep.mubr.bf16.mxu0 0
    %1156 = vmatmul.mubr.bf16.gmra.mrb[0].mxu0 %v1121
    %v1157 = vpop.f32.mrb[0].mxu0
    %v1158 = vadd.f32 %v1107, %v1157
    %v1159 = vpop.f32.mrb[0].mxu0
    %v1160 = vpop.f32.mrb[0].mxu0
    %v1161 = vadd.f32 %v1107, %v1160
    %v1162 = vpop.f32.mrb[0].mxu0
    %1163 = vdwg.mxu0
    %1166 = vrot.lane.b32.xlu0 %v1158, 120
    %v1167 = vpop.permute.xlu0 %1166
    %1168 = vrot.lane.b32.xlu0 %v1161, 120
    %v1169 = vpop.permute.xlu0 %1168
    %1172 = vrot.lane.b32.xlu0 %v1158, 112
    %v1173 = vpop.permute.xlu0 %1172
    %1174 = vrot.lane.b32.xlu0 %v1161, 112
    %v1175 = vpop.permute.xlu0 %1174
    %1178 = vrot.lane.b32.xlu0 %v1158, 104
    %v1179 = vpop.permute.xlu0 %1178
    %1180 = vrot.lane.b32.xlu0 %v1161, 104
    %v1181 = vpop.permute.xlu0 %1180
    %v1184 = vpack.c.bf16 %v1161, %v1158
    %v1185 = vpack.c.bf16 %v1169, %v1167
    %v1186 = vpack.c.bf16 %v1175, %v1173
    %v1187 = vpack.c.bf16 %v1181, %v1179
    %1192 = vrot.lane.b32.xlu0 %v1184, 96
    %v1193 = vpop.permute.xlu0 %1192
    %1194 = vrot.lane.b32.xlu0 %v1185, 96
    %v1195 = vpop.permute.xlu0 %1194
    %1196 = vrot.lane.b32.xlu0 %v1186, 96
    %v1197 = vpop.permute.xlu0 %1196
    %1198 = vrot.lane.b32.xlu0 %v1187, 96
    %v1199 = vpop.permute.xlu0 %1198
    %v1201 = vsel %vm450, %v1184, 0
    %v1204 = vsel %vm450, %v1185, 0
    %v1207 = vsel %vm450, %v1186, 0
    %v1210 = vsel %vm450, %v1187, 0
    %v1213 = vsel %vm450, %v1193, 0
    %v1216 = vsel %vm450, %v1195, 0
    %v1219 = vsel %vm450, %v1197, 0
    %v1222 = vsel %vm450, %v1199, 0
    %1224 = vmatprep.subr.bf16.mxu0 0
    %1225 = vmatpush1.bf16.xpose.msra.mxu0 %v1213
    %1226 = vmatprep.subr.bf16.mxu0 0
    %1227 = vmatpush1.bf16.xpose.msra.mxu0 %v1216
    %1228 = vmatprep.subr.bf16.mxu0 0
    %1229 = vmatpush1.bf16.xpose.msra.mxu0 %v1219
    %1230 = vmatprep.subr.bf16.mxu0 0
    %1231 = vmatpush1.bf16.xpose.msra.mxu0 %v1222
    %1232 = vmatprep.subr.bf16.mxu0 0
    %1233 = vmatpush1.bf16.xpose.msra.mxu0 0
    %1234 = vmatprep.subr.bf16.mxu0 0
    %1235 = vmatpush1.bf16.xpose.msra.mxu0 0
    %1236 = vmatprep.subr.bf16.mxu0 0
    %1237 = vmatpush1.bf16.xpose.msra.mxu0 0
    %1238 = vmatprep.subr.bf16.mxu0 0
    %1239 = vmatpush1.bf16.xpose.msra.mxu0 0
    %1240 = vmatprep.subr.bf16.mxu0 0
    %1241 = vmatpush1.bf16.xpose.msra.mxu0 0
    %1242 = vmatprep.subr.bf16.mxu0 0
    %1243 = vmatpush1.bf16.xpose.msra.mxu0 0
    %1244 = vmatprep.subr.bf16.mxu0 0
    %1245 = vmatpush1.bf16.xpose.msra.mxu0 0
    %1246 = vmatprep.subr.bf16.mxu0 0
    %1247 = vmatpush1.bf16.xpose.msra.mxu0 0
    %1248 = vmatprep.subr.bf16.mxu0 0
    %1249 = vmatpush1.bf16.xpose.msra.mxu0 0
    %1250 = vmatprep.subr.bf16.mxu0 0
    %1251 = vmatpush1.bf16.xpose.msra.mxu0 0
    %1252 = vmatprep.subr.bf16.mxu0 0
    %1253 = vmatpush1.bf16.xpose.msra.mxu0 0
    %1254 = vmatprep.subr.bf16.mxu0 0
    %1255 = vmatpush1.bf16.xpose.msra.mxu0 0
    %1256 = vmatprep.mubr.bf16.mxu0 0
    %1257 = vmatmul.mubr.bf16.gmra.mrb[0].mxu0 %v1201
    %v1258 = vpop.f32.mrb[0].mxu0
    %v1259 = vadd.f32 %v300, %v1258
    %v1260 = vpop.f32.mrb[0].mxu0
    %v1261 = vpop.f32.mrb[0].mxu0
    %v1262 = vadd.f32 %v301, %v1261
    %v1263 = vpop.f32.mrb[0].mxu0
    %1264 = vmatprep.mubr.bf16.mxu0 0
    %1265 = vmatmul.mubr.bf16.gmra.mrb[0].mxu0 %v1204
    %v1266 = vpop.f32.mrb[0].mxu0
    %v1267 = vadd.f32 %v302, %v1266
    %v1268 = vpop.f32.mrb[0].mxu0
    %v1269 = vpop.f32.mrb[0].mxu0
    %v1270 = vadd.f32 %v303, %v1269
    %v1271 = vpop.f32.mrb[0].mxu0
    %1272 = vmatprep.mubr.bf16.mxu0 0
    %1273 = vmatmul.mubr.bf16.gmra.mrb[0].mxu0 %v1207
    %v1274 = vpop.f32.mrb[0].mxu0
    %v1275 = vadd.f32 %v304, %v1274
    %v1276 = vpop.f32.mrb[0].mxu0
    %v1277 = vpop.f32.mrb[0].mxu0
    %v1278 = vadd.f32 %v305, %v1277
    %v1279 = vpop.f32.mrb[0].mxu0
    %1280 = vmatprep.mubr.bf16.mxu0 0
    %1281 = vmatmul.mubr.bf16.gmra.mrb[0].mxu0 %v1210
    %v1282 = vpop.f32.mrb[0].mxu0
    %v1283 = vadd.f32 %v306, %v1282
    %v1284 = vpop.f32.mrb[0].mxu0
    %v1285 = vpop.f32.mrb[0].mxu0
    %v1286 = vadd.f32 %v307, %v1285
    %v1287 = vpop.f32.mrb[0].mxu0
    %1288 = vdwg.mxu0
    %v1289 = vsel %vm540, %v1259, -inf
    %1290 = vmax.xlane.f32.xlu0 %v1289
    %v1291 = vpop.xlane.xlu0 %1290
    %v1292 = vsel %vm540, %v1262, -inf
    %1293 = vmax.xlane.f32.xlu0 %v1292
    %v1294 = vpop.xlane.xlu0 %1293
    %v1295 = vsel %vm540, %v1267, -inf
    %1296 = vmax.xlane.f32.xlu0 %v1295
    %v1297 = vpop.xlane.xlu0 %1296
    %v1298 = vsel %vm540, %v1270, -inf
    %1299 = vmax.xlane.f32.xlu0 %v1298
    %v1300 = vpop.xlane.xlu0 %1299
    %v1301 = vsel %vm540, %v1275, -inf
    %1302 = vmax.xlane.f32.xlu0 %v1301
    %v1303 = vpop.xlane.xlu0 %1302
    %v1304 = vsel %vm540, %v1278, -inf
    %1305 = vmax.xlane.f32.xlu0 %v1304
    %v1306 = vpop.xlane.xlu0 %1305
    %v1307 = vsel %vm540, %v1283, -inf
    %1308 = vmax.xlane.f32.xlu0 %v1307
    %v1309 = vpop.xlane.xlu0 %1308
    %v1310 = vsel %vm540, %v1286, -inf
    %1311 = vmax.xlane.f32.xlu0 %v1310
    %v1312 = vpop.xlane.xlu0 %1311
    %v1313 = vsub.f32 %v1259, %v1291
    %v1314 = vsub.f32 %v1262, %v1294
    %v1315 = vsub.f32 %v1267, %v1297
    %v1316 = vsub.f32 %v1270, %v1300
    %v1317 = vsub.f32 %v1275, %v1303
    %v1318 = vsub.f32 %v1278, %v1306
    %v1319 = vsub.f32 %v1283, %v1309
    %v1320 = vsub.f32 %v1286, %v1312
    %v1321 = vmul.f32 %v1313, 1.442695
    %v1322 = vpow.pop %v1321
    %v1323 = vmul.f32 %v1314, 1.442695
    %v1324 = vpow.pop %v1323
    %v1325 = vmul.f32 %v1315, 1.442695
    %v1326 = vpow.pop %v1325
    %v1327 = vmul.f32 %v1316, 1.442695
    %v1328 = vpow.pop %v1327
    %v1329 = vmul.f32 %v1317, 1.442695
    %v1330 = vpow.pop %v1329
    %v1331 = vmul.f32 %v1318, 1.442695
    %v1332 = vpow.pop %v1331
    %v1333 = vmul.f32 %v1319, 1.442695
    %v1334 = vpow.pop %v1333
    %v1335 = vmul.f32 %v1320, 1.442695
    %v1336 = vpow.pop %v1335
    %v1337 = vsel %vm540, %v1322, 0.0
    %1338 = vadd.xlane.f32.xlu0 %v1337
    %v1339 = vpop.xlane.xlu0 %1338
    %v1340 = vsel %vm540, %v1324, 0.0
    %1341 = vadd.xlane.f32.xlu0 %v1340
    %v1342 = vpop.xlane.xlu0 %1341
    %v1343 = vsel %vm540, %v1326, 0.0
    %1344 = vadd.xlane.f32.xlu0 %v1343
    %v1345 = vpop.xlane.xlu0 %1344
    %v1346 = vsel %vm540, %v1328, 0.0
    %1347 = vadd.xlane.f32.xlu0 %v1346
    %v1348 = vpop.xlane.xlu0 %1347
    %v1349 = vsel %vm540, %v1330, 0.0
    %1350 = vadd.xlane.f32.xlu0 %v1349
    %v1351 = vpop.xlane.xlu0 %1350
    %v1352 = vsel %vm540, %v1332, 0.0
    %1353 = vadd.xlane.f32.xlu0 %v1352
    %v1354 = vpop.xlane.xlu0 %1353
    %v1355 = vsel %vm540, %v1334, 0.0
    %1356 = vadd.xlane.f32.xlu0 %v1355
    %v1357 = vpop.xlane.xlu0 %1356
    %v1358 = vsel %vm540, %v1336, 0.0
    %1359 = vadd.xlane.f32.xlu0 %v1358
    %v1360 = vpop.xlane.xlu0 %1359
    %v1361 = vrcp.pop %v1339
    %v1362 = vrcp.pop %v1342
    %v1363 = vrcp.pop %v1345
    %v1364 = vrcp.pop %v1348
    %v1365 = vrcp.pop %v1351
    %v1366 = vrcp.pop %v1354
    %v1367 = vrcp.pop %v1357
    %v1368 = vrcp.pop %v1360
    %v1369 = vmul.f32 %v1322, %v1361
    %v1370 = vmul.f32 %v1324, %v1362
    %v1371 = vmul.f32 %v1326, %v1363
    %v1372 = vmul.f32 %v1328, %v1364
    %v1373 = vmul.f32 %v1330, %v1365
    %v1374 = vmul.f32 %v1332, %v1366
    %v1375 = vmul.f32 %v1334, %v1367
    %v1376 = vmul.f32 %v1336, %v1368
    %v1377 = vpack.c.bf16 %v1370, %v1369
    %v1378 = vpack.c.bf16 %v1372, %v1371
    %v1379 = vpack.c.bf16 %v1374, %v1373
    %v1380 = vpack.c.bf16 %v1376, %v1375
    %1381 = vrot.lane.b32.xlu0 %v1184, 64
    %v1382 = vpop.permute.xlu0 %1381
    %1383 = vrot.lane.b32.xlu0 %v1185, 64
    %v1384 = vpop.permute.xlu0 %1383
    %1385 = vrot.lane.b32.xlu0 %v1186, 64
    %v1386 = vpop.permute.xlu0 %1385
    %1387 = vrot.lane.b32.xlu0 %v1187, 64
    %v1388 = vpop.permute.xlu0 %1387
    %v1394 = vsel %vm540, %v1377, 0
    %v1397 = vsel %vm540, %v1378, 0
    %v1400 = vsel %vm540, %v1379, 0
    %v1403 = vsel %vm540, %v1380, 0
    %1405 = vmatprep.subr.bf16.mxu0 0
    %1406 = vmatpush1.bf16.msra.mxu0 %v1382
    %1407 = vmatprep.subr.bf16.mxu0 0
    %1408 = vmatpush1.bf16.msra.mxu0 %v1384
    %1409 = vmatprep.subr.bf16.mxu0 0
    %1410 = vmatpush1.bf16.msra.mxu0 %v1386
    %1411 = vmatprep.subr.bf16.mxu0 0
    %1412 = vmatpush1.bf16.msra.mxu0 %v1388
    %1413 = vmatprep.subr.bf16.mxu0 0
    %1414 = vmatpush1.bf16.msra.mxu0 0
    %1415 = vmatprep.subr.bf16.mxu0 0
    %1416 = vmatpush1.bf16.msra.mxu0 0
    %1417 = vmatprep.subr.bf16.mxu0 0
    %1418 = vmatpush1.bf16.msra.mxu0 0
    %1419 = vmatprep.subr.bf16.mxu0 0
    %1420 = vmatpush1.bf16.msra.mxu0 0
    %1421 = vmatprep.subr.bf16.mxu0 0
    %1422 = vmatpush1.bf16.msra.mxu0 0
    %1423 = vmatprep.subr.bf16.mxu0 0
    %1424 = vmatpush1.bf16.msra.mxu0 0
    %1425 = vmatprep.subr.bf16.mxu0 0
    %1426 = vmatpush1.bf16.msra.mxu0 0
    %1427 = vmatprep.subr.bf16.mxu0 0
    %1428 = vmatpush1.bf16.msra.mxu0 0
    %1429 = vmatprep.subr.bf16.mxu0 0
    %1430 = vmatpush1.bf16.msra.mxu0 0
    %1431 = vmatprep.subr.bf16.mxu0 0
    %1432 = vmatpush1.bf16.msra.mxu0 0
    %1433 = vmatprep.subr.bf16.mxu0 0
    %1434 = vmatpush1.bf16.msra.mxu0 0
    %1435 = vmatprep.subr.bf16.mxu0 0
    %1436 = vmatpush1.bf16.msra.mxu0 0
    %1437 = vmatprep.mubr.bf16.mxu0 0
    %1438 = vmatmul.mubr.bf16.gmra.mrb[0].mxu0 %v1394
    %v1439 = vpop.f32.mrb[0].mxu0
    %v1440 = vadd.f32 0.0, %v1439
    %v1441 = vpop.f32.mrb[0].mxu0
    %v1442 = vpop.f32.mrb[0].mxu0
    %v1443 = vadd.f32 0.0, %v1442
    %v1444 = vpop.f32.mrb[0].mxu0
    %1445 = vmatprep.mubr.bf16.mxu0 0
    %1446 = vmatmul.mubr.bf16.gmra.mrb[0].mxu0 %v1397
    %v1447 = vpop.f32.mrb[0].mxu0
    %v1448 = vadd.f32 0.0, %v1447
    %v1449 = vpop.f32.mrb[0].mxu0
    %v1450 = vpop.f32.mrb[0].mxu0
    %v1451 = vadd.f32 0.0, %v1450
    %v1452 = vpop.f32.mrb[0].mxu0
    %1453 = vmatprep.mubr.bf16.mxu0 0
    %1454 = vmatmul.mubr.bf16.gmra.mrb[0].mxu0 %v1400
    %v1455 = vpop.f32.mrb[0].mxu0
    %v1456 = vadd.f32 0.0, %v1455
    %v1457 = vpop.f32.mrb[0].mxu0
    %v1458 = vpop.f32.mrb[0].mxu0
    %v1459 = vadd.f32 0.0, %v1458
    %v1460 = vpop.f32.mrb[0].mxu0
    %1461 = vmatprep.mubr.bf16.mxu0 0
    %1462 = vmatmul.mubr.bf16.gmra.mrb[0].mxu0 %v1403
    %v1463 = vpop.f32.mrb[0].mxu0
    %v1464 = vadd.f32 0.0, %v1463
    %v1465 = vpop.f32.mrb[0].mxu0
    %v1466 = vpop.f32.mrb[0].mxu0
    %v1467 = vadd.f32 0.0, %v1466
    %v1468 = vpop.f32.mrb[0].mxu0
    %1469 = vdwg.mxu0
    %1472 = vrot.lane.b32.xlu0 %v1448, 8
    %v1473 = vpop.permute.xlu0 %1472
    %1474 = vrot.lane.b32.xlu0 %v1451, 8
    %v1475 = vpop.permute.xlu0 %1474
    %1480 = vrot.lane.b32.xlu0 %v1456, 16
    %v1481 = vpop.permute.xlu0 %1480
    %1482 = vrot.lane.b32.xlu0 %v1459, 16
    %v1483 = vpop.permute.xlu0 %1482
    %1488 = vrot.lane.b32.xlu0 %v1464, 24
    %v1489 = vpop.permute.xlu0 %1488
    %1490 = vrot.lane.b32.xlu0 %v1467, 24
    %v1491 = vpop.permute.xlu0 %1490
    %v1494 = vsel %vm450, %v1440, %v1473
    %v1495 = vsel %vm450, %v1443, %v1475
    %v1496 = vsel %vm748, %v1494, %v1481
    %v1497 = vsel %vm748, %v1495, %v1483
    %v1498 = vsel %vm751, %v1496, %v1489
    %v1499 = vsel %vm751, %v1497, %v1491
    %v1500 = vpack.c.bf16 %v1499, %v1498
    %s1501 = scalar_lea.vmem %s10, 16
    %v1502 = vld [vmem:[%s1501] sm:$0xf]
    %v1503 = vld [vmem:[%s1501 + $0x4] sm:$0xf]
    %v1504 = vld [vmem:[%s1501 + $0x8] sm:$0xf]
    %v1505 = vld [vmem:[%s1501 + $0xc] sm:$0xf]
    %v1506 = vld [vmem:[%s11 + $0x1] sm:$0x1]
    %v1507 = vlaneseq
    %v1508 = vshrl.u32 %v1507, 7
    %v1509 = vsub.s32 0, %v1508
    %v1510 = vrot.slane %v1506, %v1509
    %v1515 = vunpack.c.l.b16 %v1502
    %v1516 = vunpack.c.l.b16 %v1503
    %v1517 = vunpack.c.l.b16 %v1504
    %v1518 = vunpack.c.l.b16 %v1505
    %v1519 = vpack.c.b16 %v1516, %v1515
    %v1520 = vpack.c.b16 %v1518, %v1517
    %v1524 = vsel %vm256, %v1500, 0
    %1526 = vmatprep.subr.bf16.mxu0 0
    %1527 = vmatpush1.bf16.msra.mxu0 %v1519
    %1528 = vmatprep.subr.bf16.mxu0 0
    %1529 = vmatpush1.bf16.msra.mxu0 %v1520
    %1530 = vmatprep.subr.bf16.mxu0 0
    %1531 = vmatpush1.bf16.msra.mxu0 0
    %1532 = vmatprep.subr.bf16.mxu0 0
    %1533 = vmatpush1.bf16.msra.mxu0 0
    %1534 = vmatprep.subr.bf16.mxu0 0
    %1535 = vmatpush1.bf16.msra.mxu0 0
    %1536 = vmatprep.subr.bf16.mxu0 0
    %1537 = vmatpush1.bf16.msra.mxu0 0
    %1538 = vmatprep.subr.bf16.mxu0 0
    %1539 = vmatpush1.bf16.msra.mxu0 0
    %1540 = vmatprep.subr.bf16.mxu0 0
    %1541 = vmatpush1.bf16.msra.mxu0 0
    %1542 = vmatprep.subr.bf16.mxu0 0
    %1543 = vmatpush1.bf16.msra.mxu0 0
    %1544 = vmatprep.subr.bf16.mxu0 0
    %1545 = vmatpush1.bf16.msra.mxu0 0
    %1546 = vmatprep.subr.bf16.mxu0 0
    %1547 = vmatpush1.bf16.msra.mxu0 0
    %1548 = vmatprep.subr.bf16.mxu0 0
    %1549 = vmatpush1.bf16.msra.mxu0 0
    %1550 = vmatprep.subr.bf16.mxu0 0
    %1551 = vmatpush1.bf16.msra.mxu0 0
    %1552 = vmatprep.subr.bf16.mxu0 0
    %1553 = vmatpush1.bf16.msra.mxu0 0
    %1554 = vmatprep.subr.bf16.mxu0 0
    %1555 = vmatpush1.bf16.msra.mxu0 0
    %1556 = vmatprep.subr.bf16.mxu0 0
    %1557 = vmatpush1.bf16.msra.mxu0 0
    %1558 = vmatprep.mubr.bf16.mxu0 0
    %1559 = vmatmul.mubr.bf16.gmra.mrb[0].mxu0 %v1524
    %v1560 = vpop.f32.mrb[0].mxu0
    %v1561 = vadd.f32 %v1510, %v1560
    %v1562 = vpop.f32.mrb[0].mxu0
    %v1563 = vpop.f32.mrb[0].mxu0
    %v1564 = vadd.f32 %v1510, %v1563
    %v1565 = vpop.f32.mrb[0].mxu0
    %1566 = vdwg.mxu0
    %v1567 = vadd.f32 %v1055, %v1561
    %v1568 = vadd.f32 %v1056, %v1564
    %v1569 = vld [vmem:[%s12 + $0x1] sm:$0x1]
    %v1570 = vld [vmem:[%s13 + $0x1] sm:$0x1]
    %v1571 = vsel %vm256, %v1567, 0.0
    %1572 = vadd.xlane.f32.xlu0 %v1571
    %v1573 = vpop.xlane.xlu0 %1572
    %v1574 = vsel %vm256, %v1568, 0.0
    %1575 = vadd.xlane.f32.xlu0 %v1574
    %v1576 = vpop.xlane.xlu0 %1575
    %v1577 = vmul.f32 %v1573, %v263
    %v1578 = vmul.f32 %v1576, %v263
    %v1579 = vsub.f32 %v1567, %v1577
    %v1580 = vsub.f32 %v1568, %v1578
    %v1581 = vmul.f32 %v1579, %v1579
    %v1582 = vmul.f32 %v1580, %v1580
    %v1583 = vsel %vm256, %v1581, 0.0
    %1584 = vadd.xlane.f32.xlu0 %v1583
    %v1585 = vpop.xlane.xlu0 %1584
    %v1586 = vsel %vm256, %v1582, 0.0
    %1587 = vadd.xlane.f32.xlu0 %v1586
    %v1588 = vpop.xlane.xlu0 %1587
    %v1589 = vmul.f32 %v1585, %v263
    %v1590 = vmul.f32 %v1588, %v263
    %v1591 = vadd.f32 %v1589, 1e-05
    %v1592 = vadd.f32 %v1590, 1e-05
    %v1593 = vrsqrt.pop %v1591
    %v1594 = vrsqrt.pop %v1592
    %v1595 = vmul.f32 %v1579, %v1593
    %v1596 = vmul.f32 %v1580, %v1594
    %v1597 = vlaneseq
    %v1598 = vshrl.u32 %v1597, 7
    %v1599 = vsub.s32 0, %v1598
    %v1600 = vrot.slane %v1569, %v1599
    %v1601 = vmul.f32 %v1595, %v1600
    %v1602 = vmul.f32 %v1596, %v1600
    %v1603 = vlaneseq
    %v1604 = vshrl.u32 %v1603, 7
    %v1605 = vsub.s32 0, %v1604
    %v1606 = vrot.slane %v1570, %v1605
    %v1607 = vadd.f32 %v1601, %v1606
    %v1608 = vadd.f32 %v1602, %v1606
    %v1609 = vpack.c.bf16 %v1608, %v1607
    %s1610 = scalar_lea.vmem %s14, 16
    %v1611 = vld [vmem:[%s1610] sm:$0xf]
    %v1612 = vld [vmem:[%s1610 + $0x4] sm:$0xf]
    %v1613 = vld [vmem:[%s1610 + $0x8] sm:$0xf]
    %v1614 = vld [vmem:[%s1610 + $0xc] sm:$0xf]
    %v1615 = vld [vmem:[%s15 + $0x1] sm:$0x1]
    %v1616 = vlaneseq
    %v1617 = vshrl.u32 %v1616, 7
    %v1618 = vsub.s32 0, %v1617
    %v1619 = vrot.slane %v1615, %v1618
    %v1624 = vunpack.c.l.b16 %v1611
    %v1625 = vunpack.c.l.b16 %v1612
    %v1626 = vunpack.c.l.b16 %v1613
    %v1627 = vunpack.c.l.b16 %v1614
    %v1628 = vpack.c.b16 %v1625, %v1624
    %v1629 = vpack.c.b16 %v1627, %v1626
    %v1633 = vsel %vm256, %v1609, 0
    %1635 = vmatprep.subr.bf16.mxu0 0
    %1636 = vmatpush1.bf16.msra.mxu0 %v1628
    %1637 = vmatprep.subr.bf16.mxu0 0
    %1638 = vmatpush1.bf16.msra.mxu0 %v1629
    %1639 = vmatprep.subr.bf16.mxu0 0
    %1640 = vmatpush1.bf16.msra.mxu0 0
    %1641 = vmatprep.subr.bf16.mxu0 0
    %1642 = vmatpush1.bf16.msra.mxu0 0
    %1643 = vmatprep.subr.bf16.mxu0 0
    %1644 = vmatpush1.bf16.msra.mxu0 0
    %1645 = vmatprep.subr.bf16.mxu0 0
    %1646 = vmatpush1.bf16.msra.mxu0 0
    %1647 = vmatprep.subr.bf16.mxu0 0
    %1648 = vmatpush1.bf16.msra.mxu0 0
    %1649 = vmatprep.subr.bf16.mxu0 0
    %1650 = vmatpush1.bf16.msra.mxu0 0
    %1651 = vmatprep.subr.bf16.mxu0 0
    %1652 = vmatpush1.bf16.msra.mxu0 0
    %1653 = vmatprep.subr.bf16.mxu0 0
    %1654 = vmatpush1.bf16.msra.mxu0 0
    %1655 = vmatprep.subr.bf16.mxu0 0
    %1656 = vmatpush1.bf16.msra.mxu0 0
    %1657 = vmatprep.subr.bf16.mxu0 0
    %1658 = vmatpush1.bf16.msra.mxu0 0
    %1659 = vmatprep.subr.bf16.mxu0 0
    %1660 = vmatpush1.bf16.msra.mxu0 0
    %1661 = vmatprep.subr.bf16.mxu0 0
    %1662 = vmatpush1.bf16.msra.mxu0 0
    %1663 = vmatprep.subr.bf16.mxu0 0
    %1664 = vmatpush1.bf16.msra.mxu0 0
    %1665 = vmatprep.subr.bf16.mxu0 0
    %1666 = vmatpush1.bf16.msra.mxu0 0
    %1667 = vmatprep.mubr.bf16.mxu0 0
    %1668 = vmatmul.mubr.bf16.gmra.mrb[0].mxu0 %v1633
    %v1669 = vpop.f32.mrb[0].mxu0
    %v1670 = vadd.f32 %v1619, %v1669
    %v1671 = vpop.f32.mrb[0].mxu0
    %v1672 = vpop.f32.mrb[0].mxu0
    %v1673 = vadd.f32 %v1619, %v1672
    %v1674 = vpop.f32.mrb[0].mxu0
    %1675 = vdwg.mxu0
    %v1676 = vmul.f32 %v1670, 1.702
    %v1677 = vmul.f32 %v1673, 1.702
    %v1678 = vxor.u32 %v1676, 2147483648
    %v1679 = vxor.u32 %v1677, 2147483648
    %v1680 = vmul.f32 %v1678, 1.442695
    %v1681 = vpow.pop %v1680
    %v1682 = vmul.f32 %v1679, 1.442695
    %v1683 = vpow.pop %v1682
    %v1684 = vadd.f32 %v1681, 1.0
    %v1685 = vadd.f32 %v1683, 1.0
    %v1686 = vrcp.pop %v1684
    %v1687 = vmul.f32 1.0, %v1686
    %v1688 = vrcp.pop %v1685
    %v1689 = vmul.f32 1.0, %v1688
    %v1690 = vmul.f32 %v1670, %v1687
    %v1691 = vmul.f32 %v1673, %v1689
    %v1692 = vpack.c.bf16 %v1691, %v1690
    %s1693 = scalar_lea.vmem %s16, 64
    %v1694 = vld [vmem:[%s1693] sm:$0xf]
    %v1695 = vld [vmem:[%s1693 + $0x4] sm:$0xf]
    %v1696 = vld [vmem:[%s1693 + $0x8] sm:$0xf]
    %v1697 = vld [vmem:[%s1693 + $0xc] sm:$0xf]
    %v1698 = vld [vmem:[%s1693 + $0x10] sm:$0xf]
    %v1699 = vld [vmem:[%s1693 + $0x14] sm:$0xf]
    %v1700 = vld [vmem:[%s1693 + $0x18] sm:$0xf]
    %v1701 = vld [vmem:[%s1693 + $0x1c] sm:$0xf]
    %v1702 = vld [vmem:[%s1693 + $0x20] sm:$0xf]
    %v1703 = vld [vmem:[%s1693 + $0x24] sm:$0xf]
    %v1704 = vld [vmem:[%s1693 + $0x28] sm:$0xf]
    %v1705 = vld [vmem:[%s1693 + $0x2c] sm:$0xf]
    %v1706 = vld [vmem:[%s1693 + $0x30] sm:$0xf]
    %v1707 = vld [vmem:[%s1693 + $0x34] sm:$0xf]
    %v1708 = vld [vmem:[%s1693 + $0x38] sm:$0xf]
    %v1709 = vld [vmem:[%s1693 + $0x3c] sm:$0xf]
    %v1710 = vld [vmem:[%s17 + $0x1] sm:$0x1]
    %v1711 = vlaneseq
    %v1712 = vshrl.u32 %v1711, 7
    %v1713 = vsub.s32 0, %v1712
    %v1714 = vrot.slane %v1710, %v1713
    %v1731 = vunpack.c.l.b16 %v1694
    %v1732 = vunpack.c.l.b16 %v1695
    %v1733 = vunpack.c.l.b16 %v1696
    %v1734 = vunpack.c.l.b16 %v1697
    %v1735 = vunpack.c.l.b16 %v1698
    %v1736 = vunpack.c.l.b16 %v1699
    %v1737 = vunpack.c.l.b16 %v1700
    %v1738 = vunpack.c.l.b16 %v1701
    %v1739 = vunpack.c.l.b16 %v1702
    %v1740 = vunpack.c.l.b16 %v1703
    %v1741 = vunpack.c.l.b16 %v1704
    %v1742 = vunpack.c.l.b16 %v1705
    %v1743 = vunpack.c.l.b16 %v1706
    %v1744 = vunpack.c.l.b16 %v1707
    %v1745 = vunpack.c.l.b16 %v1708
    %v1746 = vunpack.c.l.b16 %v1709
    %v1747 = vpack.c.b16 %v1732, %v1731
    %v1748 = vpack.c.b16 %v1734, %v1733
    %v1749 = vpack.c.b16 %v1736, %v1735
    %v1750 = vpack.c.b16 %v1738, %v1737
    %v1751 = vpack.c.b16 %v1740, %v1739
    %v1752 = vpack.c.b16 %v1742, %v1741
    %v1753 = vpack.c.b16 %v1744, %v1743
    %v1754 = vpack.c.b16 %v1746, %v1745
    %1763 = vmatprep.subr.bf16.mxu0 0
    %1764 = vmatpush1.bf16.msra.mxu0 %v1747
    %1765 = vmatprep.subr.bf16.mxu0 0
    %1766 = vmatpush1.bf16.msra.mxu0 %v1748
    %1767 = vmatprep.subr.bf16.mxu0 0
    %1768 = vmatpush1.bf16.msra.mxu0 %v1749
    %1769 = vmatprep.subr.bf16.mxu0 0
    %1770 = vmatpush1.bf16.msra.mxu0 %v1750
    %1771 = vmatprep.subr.bf16.mxu0 0
    %1772 = vmatpush1.bf16.msra.mxu0 %v1751
    %1773 = vmatprep.subr.bf16.mxu0 0
    %1774 = vmatpush1.bf16.msra.mxu0 %v1752
    %1775 = vmatprep.subr.bf16.mxu0 0
    %1776 = vmatpush1.bf16.msra.mxu0 %v1753
    %1777 = vmatprep.subr.bf16.mxu0 0
    %1778 = vmatpush1.bf16.msra.mxu0 %v1754
    %1779 = vmatprep.subr.bf16.mxu0 0
    %1780 = vmatpush1.bf16.msra.mxu0 0
    %1781 = vmatprep.subr.bf16.mxu0 0
    %1782 = vmatpush1.bf16.msra.mxu0 0
    %1783 = vmatprep.subr.bf16.mxu0 0
    %1784 = vmatpush1.bf16.msra.mxu0 0
    %1785 = vmatprep.subr.bf16.mxu0 0
    %1786 = vmatpush1.bf16.msra.mxu0 0
    %1787 = vmatprep.subr.bf16.mxu0 0
    %1788 = vmatpush1.bf16.msra.mxu0 0
    %1789 = vmatprep.subr.bf16.mxu0 0
    %1790 = vmatpush1.bf16.msra.mxu0 0
    %1791 = vmatprep.subr.bf16.mxu0 0
    %1792 = vmatpush1.bf16.msra.mxu0 0
    %1793 = vmatprep.subr.bf16.mxu0 0
    %1794 = vmatpush1.bf16.msra.mxu0 0
    %1795 = vmatprep.mubr.bf16.mxu0 0
    %1796 = vmatmul.mubr.bf16.gmra.mrb[0].mxu0 %v1692
    %v1797 = vpop.f32.mrb[0].mxu0
    %v1798 = vadd.f32 %v1714, %v1797
    %v1799 = vpop.f32.mrb[0].mxu0
    %v1800 = vpop.f32.mrb[0].mxu0
    %v1801 = vadd.f32 %v1714, %v1800
    %v1802 = vpop.f32.mrb[0].mxu0
    %1803 = vdwg.mxu0
    %v1804 = vadd.f32 %v1567, %v1798
    %v1805 = vadd.f32 %v1568, %v1801
    %v1806 = vld [vmem:[%s18] sm:$0x1]
    %v1807 = vld [vmem:[%s19] sm:$0x1]
    %v1810 = vrot.slane %v1805, 7
    %vm1811 = vcmask 1041409
    %v1812 = vsel %vm1811, %v1810, %v1804
    %vm1814 = vcmask 254976
    %v1815 = vsel %vm1814, %v1812, 0.0
    %1816 = vadd.xlane.f32.xlu0 %v1815
    %v1817 = vpop.xlane.xlu0 %1816
    %v1818 = vmul.f32 %v1817, %v263
    %v1820 = vrot.slane %v1818, 1
    %v1823 = vsub.f32 %v1804, %v1818
    %v1824 = vsub.f32 %v1805, %v1820
    %v1825 = vmul.f32 %v1823, %v1823
    %v1826 = vmul.f32 %v1824, %v1824
    %v1829 = vrot.slane %v1826, 7
    %v1830 = vsel %vm1811, %v1829, %v1825
    %v1832 = vsel %vm1814, %v1830, 0.0
    %1833 = vadd.xlane.f32.xlu0 %v1832
    %v1834 = vpop.xlane.xlu0 %1833
    %v1835 = vmul.f32 %v1834, %v263
    %v1836 = vadd.f32 %v1835, 1e-05
    %v1837 = vrsqrt.pop %v1836
    %v1839 = vrot.slane %v1837, 1
    %v1842 = vmul.f32 %v1823, %v1837
    %v1843 = vmul.f32 %v1824, %v1839
    %v1845 = vlaneseq
    %v1846 = vshrl.u32 %v1845, 7
    %v1847 = vsub.s32 0, %v1846
    %v1848 = vrot.slane %v1806, %v1847
    %v1850 = vmul.f32 %v1842, %v1848
    %v1851 = vmul.f32 %v1843, %v1848
    %v1853 = vlaneseq
    %v1854 = vshrl.u32 %v1853, 7
    %v1855 = vsub.s32 0, %v1854
    %v1856 = vrot.slane %v1807, %v1855
    %v1858 = vadd.f32 %v1850, %v1856
    %v1859 = vadd.f32 %v1851, %v1856
    %v1860 = vpack.c.bf16 %v1858, %v1858
    %v1861 = vpack.c.bf16 %v1859, %v1859
    %v1862 = vld [vmem:[%s20] sm:$0xf]
    %v1863 = vld [vmem:[%s20 + $0x4] sm:$0xf]
    %v1864 = vld [vmem:[%s20 + $0x8] sm:$0xf]
    %v1865 = vld [vmem:[%s20 + $0xc] sm:$0xf]
    %v1868 = vunpack.c.l.b16 %v1860
    %v1869 = vunpack.c.l.b16 %v1861
    %v1870 = vrot.slane %v1869, 7
    %v1871 = vsel %vm1811, %v1870, %v1868
    %v1872 = vpack.c.b16 %v1871, %v1871
    %v1877 = vunpack.c.l.b16 %v1862
    %v1878 = vunpack.c.l.b16 %v1863
    %v1879 = vunpack.c.l.b16 %v1864
    %v1880 = vunpack.c.l.b16 %v1865
    %v1881 = vpack.c.b16 %v1878, %v1877
    %v1882 = vpack.c.b16 %v1880, %v1879
    %v1886 = vsel %vm256, %v1872, 0
    %1888 = vmatprep.subr.bf16.mxu0 0
    %1889 = vmatpush1.bf16.msra.mxu0 %v1881
    %1890 = vmatprep.subr.bf16.mxu0 0
    %1891 = vmatpush1.bf16.msra.mxu0 %v1882
    %1892 = vmatprep.subr.bf16.mxu0 0
    %1893 = vmatpush1.bf16.msra.mxu0 0
    %1894 = vmatprep.subr.bf16.mxu0 0
    %1895 = vmatpush1.bf16.msra.mxu0 0
    %1896 = vmatprep.subr.bf16.mxu0 0
    %1897 = vmatpush1.bf16.msra.mxu0 0
    %1898 = vmatprep.subr.bf16.mxu0 0
    %1899 = vmatpush1.bf16.msra.mxu0 0
    %1900 = vmatprep.subr.bf16.mxu0 0
    %1901 = vmatpush1.bf16.msra.mxu0 0
    %1902 = vmatprep.subr.bf16.mxu0 0
    %1903 = vmatpush1.bf16.msra.mxu0 0
    %1904 = vmatprep.subr.bf16.mxu0 0
    %1905 = vmatpush1.bf16.msra.mxu0 0
    %1906 = vmatprep.subr.bf16.mxu0 0
    %1907 = vmatpush1.bf16.msra.mxu0 0
    %1908 = vmatprep.subr.bf16.mxu0 0
    %1909 = vmatpush1.bf16.msra.mxu0 0
    %1910 = vmatprep.subr.bf16.mxu0 0
    %1911 = vmatpush1.bf16.msra.mxu0 0
    %1912 = vmatprep.subr.bf16.mxu0 0
    %1913 = vmatpush1.bf16.msra.mxu0 0
    %1914 = vmatprep.subr.bf16.mxu0 0
    %1915 = vmatpush1.bf16.msra.mxu0 0
    %1916 = vmatprep.subr.bf16.mxu0 0
    %1917 = vmatpush1.bf16.msra.mxu0 0
    %1918 = vmatprep.subr.bf16.mxu0 0
    %1919 = vmatpush1.bf16.msra.mxu0 0
    %1920 = vmatprep.mubr.bf16.mxu0 0
    %1921 = vmatmul.mubr.bf16.gmra.mrb[0].mxu0 %v1886
    %v1922 = vpop.f32.mrb[0].mxu0
    %v1923 = vadd.f32 0.0, %v1922
    %v1924 = vpop.f32.mrb[0].mxu0
    %v1925 = vpop.f32.mrb[0].mxu0
    %v1926 = vpop.f32.mrb[0].mxu0
    %1927 = vdwg.mxu0
    %vm1928 = vcmask 123904
    %1929 = vst.msk [vmem:[#allocation2] sm:$0x3] %vm1928, %v1923
    // Predicated region
    $region86: #{tpu_custom_call.1} parent=1 // pred_check
      _
    $region87: #{tpu_custom_call.1} parent=1 // pred_check_branch
      %1931 = sbr.rel (0) target = $region89
    $region88: #{tpu_custom_call.1} parent=1 // pred_region
      %s1933 = ssub.s32 32, 32
      %1934 = vsyncadd [#allocation3], %s1933
      %s1936 = sshll.u32 [#allocation2], 4
      %s1937 = int_to_ptr.vmem [resolvable:$true] %s1936
      %1939 = dma.vmem_to_hbm [thread:$0]  %s1937, 32, %s21, [#allocation3]
    $region89: #{tpu_custom_call.1} parent=1 // pred_fallthru
      _
    // Predicated region
    $region90: #{tpu_custom_call.1} parent=1 // pred_check
      _
    $region91: #{tpu_custom_call.1} parent=1 // pred_check_branch
      %1941 = sbr.rel (0) target = $region93
    $region92: #{tpu_custom_call.1} parent=1 // pred_region
      %1942 = dma.done [#allocation3], 32
    $region93: #{tpu_custom_call.1} parent=1 // pred_fallthru
      _
    %1943 = vsyncpa [#allocation3], 1

</llo_original>
